<compile_context>
chip_gen: v5e
topology: v5e:2x2
jax: 0.10.0
libtpu: 0.0.40
codegen_flags: <defaults>
</compile_context>

<pallas_src>
import math
from functools import partial

import jax
import jax.numpy as jnp
from jax.experimental import pallas as pl
from jax.experimental.pallas import tpu as pltpu

VOCAB = 1000
VOCAB_PAD = 1024           # pad vocab to a multiple of 128 -> unmasked lane-dense stores
D_MODEL = 64
N_LAYERS = 2
N_HEADS = 4
HEAD_DIM = D_MODEL // N_HEADS
D_FF = 128
LN_EPS = 1e-5
SCALE = 1.0 / math.sqrt(HEAD_DIM)      # 0.25, folded into the Q projection at init
NEG_BIG = -1e30                        # finite "-inf" for the batch mask (avoids inf/NaN paths)


def _layer_norm(y, gamma, beta):
    # f32 path (v5e VPU has no bf16); biased variance like torch.nn.LayerNorm,
    # computed in one pass as E[y^2] - mu^2.
    mu = jnp.mean(y, axis=-1, keepdims=True)
    ms = jnp.mean(y * y, axis=-1, keepdims=True)
    var = ms - mu * mu
    return (y - mu) * jax.lax.rsqrt(var + LN_EPS) * gamma + beta


def _bf16_dot(a_f32, w_bf16):
    # bf16 MXU operands, f32 accumulation
    return jnp.dot(a_f32.astype(jnp.bfloat16), w_bf16,
                   preferred_element_type=jnp.float32)


def _fused_forward_kernel(n_batch, seq_len,
                          ids_ref, emb_ref,
                          wqkv_ref, bqkv_ref, wo_ref, bo_ref,
                          ln1g_ref, ln1b_ref,
                          w1_ref, b1_ref, w2_ref, b2_ref,
                          ln2g_ref, ln2b_ref,
                          wout_ref, bout_ref,
                          logits_ref,
                          x_scratch):
    n_tok = n_batch * seq_len

    # ---- fused embedding gather: dynamic row reads from the VMEM-resident table ----
    for t in range(n_tok):                                             # static unroll (16 rows)
        x_scratch[t:t + 1, :] = emb_ref[pl.ds(ids_ref[t], 1), :]
    x = x_scratch[...]                                                 # (T, E) f32, row = l*N + n

    # ---- block-diagonal batch mask, built once outside the layer loop ----
    # rows i, j are in the same batch element <=> i % N == j % N (l-major slab).
    # Division/rem-free via exact f32 floor math (all plain VPU ops).
    ri = jax.lax.broadcasted_iota(jnp.int32, (n_tok, n_tok), 0).astype(jnp.float32)
    ci = jax.lax.broadcasted_iota(jnp.int32, (n_tok, n_tok), 1).astype(jnp.float32)
    nb = jnp.float32(n_batch)
    same = (ri - nb * jnp.floor(ri / nb)) == (ci - nb * jnp.floor(ci / nb))
    mask = jnp.where(same, 0.0, NEG_BIG).astype(jnp.float32)

    for layer in range(N_LAYERS):                                      # static unroll (2 layers)
        # ---- fused QKV: one lane-dense (E -> 3E) matmul + one bias add (scale pre-folded) ----
        qkv = _bf16_dot(x, wqkv_ref[layer]) + bqkv_ref[layer]          # (T, 192) f32
        wo_l = wo_ref[layer]                                           # (E, E) bf16

        # ---- per-head attention on the full token slab, projection fused per head:
        #      attn = sum_h softmax(q_h k_h^T + mask) v_h @ Wo[h*Hd:(h+1)*Hd, :]
        attn = None
        for h in range(N_HEADS):
            c0 = h * HEAD_DIM
            q_h = qkv[:, c0:c0 + HEAD_DIM].astype(jnp.bfloat16)                        # (T, Hd)
            k_h = qkv[:, D_MODEL + c0:D_MODEL + c0 + HEAD_DIM].astype(jnp.bfloat16)
            v_h = qkv[:, 2 * D_MODEL + c0:2 * D_MODEL + c0 + HEAD_DIM].astype(jnp.bfloat16)

            s = jax.lax.dot_general(q_h, k_h, (((1,), (1,)), ((), ())),
                                    preferred_element_type=jnp.float32)                # (T, T)
            s = s + mask
            s = s - jnp.max(s, axis=-1, keepdims=True)
            p = jnp.exp(s)
            p = p * pl.reciprocal(jnp.sum(p, axis=-1, keepdims=True), approx=True)
            o_h = jnp.dot(p.astype(jnp.bfloat16), v_h,
                          preferred_element_type=jnp.float32)                          # (T, Hd)

            contrib = jnp.dot(o_h.astype(jnp.bfloat16), wo_l[c0:c0 + HEAD_DIM, :],
                              preferred_element_type=jnp.float32)                      # (T, E)
            attn = contrib if attn is None else attn + contrib
        attn = attn + bo_ref[layer]

        # ---- residual + LayerNorm 1 ----
        x1 = _layer_norm(x + attn, ln1g_ref[layer], ln1b_ref[layer])

        # ---- feed-forward + residual + LayerNorm 2 ----
        hid = jnp.maximum(_bf16_dot(x1, w1_ref[layer]) + b1_ref[layer], 0.0)
        ff = _bf16_dot(hid, w2_ref[layer]) + b2_ref[layer]
        x = _layer_norm(x1 + ff, ln2g_ref[layer], ln2b_ref[layer])

    # ---- output linear, vocab padded to 1024 for an unmasked lane-dense store ----
    logits_ref[...] = _bf16_dot(x, wout_ref[...]) + bout_ref[...]


def init_params(key):
    keys = jax.random.split(key, 2 + N_LAYERS)
    params = {"embedding": 0.02 * jax.random.normal(keys[0], (VOCAB, D_MODEL), jnp.float32)}

    stacks = {name: [] for name in
              ("wqkv_t", "bqkv", "wo_t", "bo", "ln1_g", "ln1_b",
               "w1_t", "b1", "w2_t", "b2", "ln2_g", "ln2_b")}
    for i in range(N_LAYERS):
        lk = jax.random.split(keys[1 + i], 8)
        in_proj_w = 0.02 * jax.random.normal(lk[0], (3 * D_MODEL, D_MODEL), jnp.float32)
        in_proj_b = 0.01 * jax.random.normal(lk[1], (3 * D_MODEL,), jnp.float32)
        wo = 0.02 * jax.random.normal(lk[2], (D_MODEL, D_MODEL), jnp.float32)
        bo = 0.01 * jax.random.normal(lk[3], (D_MODEL,), jnp.float32)
        w1 = 0.02 * jax.random.normal(lk[4], (D_FF, D_MODEL), jnp.float32)
        b1 = 0.01 * jax.random.normal(lk[5], (D_FF,), jnp.float32)
        w2 = 0.02 * jax.random.normal(lk[6], (D_MODEL, D_FF), jnp.float32)
        b2 = 0.01 * jax.random.normal(lk[7], (D_MODEL,), jnp.float32)

        # pre-transposed so the kernel computes x @ W^T + b like torch Linear.
        # Fold the 1/sqrt(head_dim) attention scale into the Q projection weight + bias
        # (SCALE = 0.25 is a power of two -> exact, also after the bf16 cast).
        wqkv_t = in_proj_w.T                                          # (E, 3E) cols = [q | k | v]
        wqkv_t = wqkv_t.at[:, :D_MODEL].multiply(SCALE)
        bqkv = in_proj_b.at[:D_MODEL].multiply(SCALE)

        stacks["wqkv_t"].append(wqkv_t.astype(jnp.bfloat16))
        stacks["bqkv"].append(bqkv.reshape(1, 3 * D_MODEL))
        stacks["wo_t"].append(wo.T.astype(jnp.bfloat16))
        stacks["bo"].append(bo.reshape(1, D_MODEL))
        stacks["ln1_g"].append(jnp.ones((1, D_MODEL), jnp.float32))
        stacks["ln1_b"].append(jnp.zeros((1, D_MODEL), jnp.float32))
        stacks["w1_t"].append(w1.T.astype(jnp.bfloat16))
        stacks["b1"].append(b1.reshape(1, D_FF))
        stacks["w2_t"].append(w2.T.astype(jnp.bfloat16))
        stacks["b2"].append(b2.reshape(1, D_MODEL))
        stacks["ln2_g"].append(jnp.ones((1, D_MODEL), jnp.float32))
        stacks["ln2_b"].append(jnp.zeros((1, D_MODEL), jnp.float32))
    for name, vals in stacks.items():
        params[name] = jnp.stack(vals)                                 # leading layer dim

    out_w = 0.02 * jax.random.normal(jax.random.fold_in(key, 123),
                                     (VOCAB, D_MODEL), jnp.float32)
    out_w_t = jnp.zeros((D_MODEL, VOCAB_PAD), jnp.float32).at[:, :VOCAB].set(out_w.T)
    params["out_w_t"] = out_w_t.astype(jnp.bfloat16)                   # zero-padded cols
    params["out_b"] = jnp.zeros((1, VOCAB_PAD), jnp.float32)
    return params


def simple_transformer_forward(params, input_ids, attention_mask=None, labels=None):
    # attention_mask / labels accepted but unused, matching the PyTorch forward.
    L, N = input_ids.shape
    # l-major token order (row = l*N + n): plain reshape, no transpose on input or output.
    ids = input_ids.reshape(L * N).astype(jnp.int32)

    args = (ids, params["embedding"],
            params["wqkv_t"], params["bqkv"],
            params["wo_t"], params["bo"],
            params["ln1_g"], params["ln1_b"],
            params["w1_t"], params["b1"], params["w2_t"], params["b2"],
            params["ln2_g"], params["ln2_b"],
            params["out_w_t"], params["out_b"])

    vmem = pl.BlockSpec(memory_space=pltpu.MemorySpace.VMEM)
    smem = pl.BlockSpec(memory_space=pltpu.MemorySpace.SMEM)

    logits_pad = pl.pallas_call(
        partial(_fused_forward_kernel, N, L),
        out_shape=jax.ShapeDtypeStruct((N * L, VOCAB_PAD), jnp.float32),
        in_specs=[smem] + [vmem] * (len(args) - 1),
        out_specs=vmem,
        scratch_shapes=[pltpu.VMEM((N * L, D_MODEL), jnp.float32)],    # embedding-gather slab
    )(*args)

    logits = logits_pad[:, :VOCAB]                                     # drop vocab padding
    return logits.reshape(L, N, VOCAB)                                 # (L, N, vocab), no transpose


if __name__ == "__main__":
    root = jax.random.PRNGKey(0)
    pkey, ikey = jax.random.split(root)
    params = init_params(pkey)
    # small shapes: seq_len=8, batch=2
    input_ids = jax.random.randint(ikey, (8, 2), 0, VOCAB, dtype=jnp.int32)
    fwd = jax.jit(simple_transformer_forward)
    logits = fwd(params, input_ids)
    logits = jax.block_until_ready(logits)
    assert logits.shape == (8, 2, VOCAB), logits.shape
    assert bool(jnp.all(jnp.isfinite(logits)))
    print("KERNEL_OK")
</pallas_src>

<mosaic_0001>
module attributes {stable_mosaic.version = 11 : i64} {
  func.func @_fused_forward_kernel(%arg0: memref<16xi32, #tpu.memory_space<smem>>, %arg1: memref<1000x64xf32, #tpu.memory_space<vmem>>, %arg2: memref<2x64x192xbf16, #tpu.memory_space<vmem>>, %arg3: memref<2x1x192xf32, #tpu.memory_space<vmem>>, %arg4: memref<2x64x64xbf16, #tpu.memory_space<vmem>>, %arg5: memref<2x1x64xf32, #tpu.memory_space<vmem>>, %arg6: memref<2x1x64xf32, #tpu.memory_space<vmem>>, %arg7: memref<2x1x64xf32, #tpu.memory_space<vmem>>, %arg8: memref<2x64x128xbf16, #tpu.memory_space<vmem>>, %arg9: memref<2x1x128xf32, #tpu.memory_space<vmem>>, %arg10: memref<2x128x64xbf16, #tpu.memory_space<vmem>>, %arg11: memref<2x1x64xf32, #tpu.memory_space<vmem>>, %arg12: memref<2x1x64xf32, #tpu.memory_space<vmem>>, %arg13: memref<2x1x64xf32, #tpu.memory_space<vmem>>, %arg14: memref<64x1024xbf16, #tpu.memory_space<vmem>>, %arg15: memref<1x1024xf32, #tpu.memory_space<vmem>>, %arg16: memref<16x1024xf32, #tpu.memory_space<vmem>>, %arg17: memref<16x64xf32, #tpu.memory_space<vmem>>) attributes {dimension_semantics = [], scalar_prefetch = 0 : i64, scratch_operands = 1 : i64, tpu.core_type = #tpu.core_type<tc>} {
    %c0 = arith.constant 0 : index
    %0 = memref.load %arg0[%c0] : memref<16xi32, #tpu.memory_space<smem>>
    %1 = arith.index_cast %0 : i32 to index
    %c0_0 = arith.constant 0 : index
    %2 = vector.load %arg1[%1, %c0_0] : memref<1000x64xf32, #tpu.memory_space<vmem>>, vector<1x64xf32>
    %c0_1 = arith.constant 0 : index
    %c0_2 = arith.constant 0 : index
    %3 = vector.load %arg17[%c0_1, %c0_2] : memref<16x64xf32, #tpu.memory_space<vmem>>, vector<1x64xf32>
    tpu.vector_store %arg17[%c0_1, %c0_2], %2 {strides = array<i32>} : memref<16x64xf32, #tpu.memory_space<vmem>>, vector<1x64xf32>,
    %c1 = arith.constant 1 : index
    %4 = memref.load %arg0[%c1] : memref<16xi32, #tpu.memory_space<smem>>
    %5 = arith.index_cast %4 : i32 to index
    %c0_3 = arith.constant 0 : index
    %6 = vector.load %arg1[%5, %c0_3] : memref<1000x64xf32, #tpu.memory_space<vmem>>, vector<1x64xf32>
    %c1_4 = arith.constant 1 : index
    %c0_5 = arith.constant 0 : index
    %7 = vector.load %arg17[%c1_4, %c0_5] : memref<16x64xf32, #tpu.memory_space<vmem>>, vector<1x64xf32>
    tpu.vector_store %arg17[%c1_4, %c0_5], %6 {strides = array<i32>} : memref<16x64xf32, #tpu.memory_space<vmem>>, vector<1x64xf32>,
    %c2 = arith.constant 2 : index
    %8 = memref.load %arg0[%c2] : memref<16xi32, #tpu.memory_space<smem>>
    %9 = arith.index_cast %8 : i32 to index
    %c0_6 = arith.constant 0 : index
    %10 = vector.load %arg1[%9, %c0_6] : memref<1000x64xf32, #tpu.memory_space<vmem>>, vector<1x64xf32>
    %c2_7 = arith.constant 2 : index
    %c0_8 = arith.constant 0 : index
    %11 = vector.load %arg17[%c2_7, %c0_8] : memref<16x64xf32, #tpu.memory_space<vmem>>, vector<1x64xf32>
    tpu.vector_store %arg17[%c2_7, %c0_8], %10 {strides = array<i32>} : memref<16x64xf32, #tpu.memory_space<vmem>>, vector<1x64xf32>,
    %c3 = arith.constant 3 : index
    %12 = memref.load %arg0[%c3] : memref<16xi32, #tpu.memory_space<smem>>
    %13 = arith.index_cast %12 : i32 to index
    %c0_9 = arith.constant 0 : index
    %14 = vector.load %arg1[%13, %c0_9] : memref<1000x64xf32, #tpu.memory_space<vmem>>, vector<1x64xf32>
    %c3_10 = arith.constant 3 : index
    %c0_11 = arith.constant 0 : index
    %15 = vector.load %arg17[%c3_10, %c0_11] : memref<16x64xf32, #tpu.memory_space<vmem>>, vector<1x64xf32>
    tpu.vector_store %arg17[%c3_10, %c0_11], %14 {strides = array<i32>} : memref<16x64xf32, #tpu.memory_space<vmem>>, vector<1x64xf32>,
    %c4 = arith.constant 4 : index
    %16 = memref.load %arg0[%c4] : memref<16xi32, #tpu.memory_space<smem>>
    %17 = arith.index_cast %16 : i32 to index
    %c0_12 = arith.constant 0 : index
    %18 = vector.load %arg1[%17, %c0_12] : memref<1000x64xf32, #tpu.memory_space<vmem>>, vector<1x64xf32>
    %c4_13 = arith.constant 4 : index
    %c0_14 = arith.constant 0 : index
    %19 = vector.load %arg17[%c4_13, %c0_14] : memref<16x64xf32, #tpu.memory_space<vmem>>, vector<1x64xf32>
    tpu.vector_store %arg17[%c4_13, %c0_14], %18 {strides = array<i32>} : memref<16x64xf32, #tpu.memory_space<vmem>>, vector<1x64xf32>,
    %c5 = arith.constant 5 : index
    %20 = memref.load %arg0[%c5] : memref<16xi32, #tpu.memory_space<smem>>
    %21 = arith.index_cast %20 : i32 to index
    %c0_15 = arith.constant 0 : index
    %22 = vector.load %arg1[%21, %c0_15] : memref<1000x64xf32, #tpu.memory_space<vmem>>, vector<1x64xf32>
    %c5_16 = arith.constant 5 : index
    %c0_17 = arith.constant 0 : index
    %23 = vector.load %arg17[%c5_16, %c0_17] : memref<16x64xf32, #tpu.memory_space<vmem>>, vector<1x64xf32>
    tpu.vector_store %arg17[%c5_16, %c0_17], %22 {strides = array<i32>} : memref<16x64xf32, #tpu.memory_space<vmem>>, vector<1x64xf32>,
    %c6 = arith.constant 6 : index
    %24 = memref.load %arg0[%c6] : memref<16xi32, #tpu.memory_space<smem>>
    %25 = arith.index_cast %24 : i32 to index
    %c0_18 = arith.constant 0 : index
    %26 = vector.load %arg1[%25, %c0_18] : memref<1000x64xf32, #tpu.memory_space<vmem>>, vector<1x64xf32>
    %c6_19 = arith.constant 6 : index
    %c0_20 = arith.constant 0 : index
    %27 = vector.load %arg17[%c6_19, %c0_20] : memref<16x64xf32, #tpu.memory_space<vmem>>, vector<1x64xf32>
    tpu.vector_store %arg17[%c6_19, %c0_20], %26 {strides = array<i32>} : memref<16x64xf32, #tpu.memory_space<vmem>>, vector<1x64xf32>,
    %c7 = arith.constant 7 : index
    %28 = memref.load %arg0[%c7] : memref<16xi32, #tpu.memory_space<smem>>
    %29 = arith.index_cast %28 : i32 to index
    %c0_21 = arith.constant 0 : index
    %30 = vector.load %arg1[%29, %c0_21] : memref<1000x64xf32, #tpu.memory_space<vmem>>, vector<1x64xf32>
    %c7_22 = arith.constant 7 : index
    %c0_23 = arith.constant 0 : index
    %31 = vector.load %arg17[%c7_22, %c0_23] : memref<16x64xf32, #tpu.memory_space<vmem>>, vector<1x64xf32>
    tpu.vector_store %arg17[%c7_22, %c0_23], %30 {strides = array<i32>} : memref<16x64xf32, #tpu.memory_space<vmem>>, vector<1x64xf32>,
    %c8 = arith.constant 8 : index
    %32 = memref.load %arg0[%c8] : memref<16xi32, #tpu.memory_space<smem>>
    %33 = arith.index_cast %32 : i32 to index
    %c0_24 = arith.constant 0 : index
    %34 = vector.load %arg1[%33, %c0_24] : memref<1000x64xf32, #tpu.memory_space<vmem>>, vector<1x64xf32>
    %c8_25 = arith.constant 8 : index
    %c0_26 = arith.constant 0 : index
    %35 = vector.load %arg17[%c8_25, %c0_26] : memref<16x64xf32, #tpu.memory_space<vmem>>, vector<1x64xf32>
    tpu.vector_store %arg17[%c8_25, %c0_26], %34 {strides = array<i32>} : memref<16x64xf32, #tpu.memory_space<vmem>>, vector<1x64xf32>,
    %c9 = arith.constant 9 : index
    %36 = memref.load %arg0[%c9] : memref<16xi32, #tpu.memory_space<smem>>
    %37 = arith.index_cast %36 : i32 to index
    %c0_27 = arith.constant 0 : index
    %38 = vector.load %arg1[%37, %c0_27] : memref<1000x64xf32, #tpu.memory_space<vmem>>, vector<1x64xf32>
    %c9_28 = arith.constant 9 : index
    %c0_29 = arith.constant 0 : index
    %39 = vector.load %arg17[%c9_28, %c0_29] : memref<16x64xf32, #tpu.memory_space<vmem>>, vector<1x64xf32>
    tpu.vector_store %arg17[%c9_28, %c0_29], %38 {strides = array<i32>} : memref<16x64xf32, #tpu.memory_space<vmem>>, vector<1x64xf32>,
    %c10 = arith.constant 10 : index
    %40 = memref.load %arg0[%c10] : memref<16xi32, #tpu.memory_space<smem>>
    %41 = arith.index_cast %40 : i32 to index
    %c0_30 = arith.constant 0 : index
    %42 = vector.load %arg1[%41, %c0_30] : memref<1000x64xf32, #tpu.memory_space<vmem>>, vector<1x64xf32>
    %c10_31 = arith.constant 10 : index
    %c0_32 = arith.constant 0 : index
    %43 = vector.load %arg17[%c10_31, %c0_32] : memref<16x64xf32, #tpu.memory_space<vmem>>, vector<1x64xf32>
    tpu.vector_store %arg17[%c10_31, %c0_32], %42 {strides = array<i32>} : memref<16x64xf32, #tpu.memory_space<vmem>>, vector<1x64xf32>,
    %c11 = arith.constant 11 : index
    %44 = memref.load %arg0[%c11] : memref<16xi32, #tpu.memory_space<smem>>
    %45 = arith.index_cast %44 : i32 to index
    %c0_33 = arith.constant 0 : index
    %46 = vector.load %arg1[%45, %c0_33] : memref<1000x64xf32, #tpu.memory_space<vmem>>, vector<1x64xf32>
    %c11_34 = arith.constant 11 : index
    %c0_35 = arith.constant 0 : index
    %47 = vector.load %arg17[%c11_34, %c0_35] : memref<16x64xf32, #tpu.memory_space<vmem>>, vector<1x64xf32>
    tpu.vector_store %arg17[%c11_34, %c0_35], %46 {strides = array<i32>} : memref<16x64xf32, #tpu.memory_space<vmem>>, vector<1x64xf32>,
    %c12 = arith.constant 12 : index
    %48 = memref.load %arg0[%c12] : memref<16xi32, #tpu.memory_space<smem>>
    %49 = arith.index_cast %48 : i32 to index
    %c0_36 = arith.constant 0 : index
    %50 = vector.load %arg1[%49, %c0_36] : memref<1000x64xf32, #tpu.memory_space<vmem>>, vector<1x64xf32>
    %c12_37 = arith.constant 12 : index
    %c0_38 = arith.constant 0 : index
    %51 = vector.load %arg17[%c12_37, %c0_38] : memref<16x64xf32, #tpu.memory_space<vmem>>, vector<1x64xf32>
    tpu.vector_store %arg17[%c12_37, %c0_38], %50 {strides = array<i32>} : memref<16x64xf32, #tpu.memory_space<vmem>>, vector<1x64xf32>,
    %c13 = arith.constant 13 : index
    %52 = memref.load %arg0[%c13] : memref<16xi32, #tpu.memory_space<smem>>
    %53 = arith.index_cast %52 : i32 to index
    %c0_39 = arith.constant 0 : index
    %54 = vector.load %arg1[%53, %c0_39] : memref<1000x64xf32, #tpu.memory_space<vmem>>, vector<1x64xf32>
    %c13_40 = arith.constant 13 : index
    %c0_41 = arith.constant 0 : index
    %55 = vector.load %arg17[%c13_40, %c0_41] : memref<16x64xf32, #tpu.memory_space<vmem>>, vector<1x64xf32>
    tpu.vector_store %arg17[%c13_40, %c0_41], %54 {strides = array<i32>} : memref<16x64xf32, #tpu.memory_space<vmem>>, vector<1x64xf32>,
    %c14 = arith.constant 14 : index
    %56 = memref.load %arg0[%c14] : memref<16xi32, #tpu.memory_space<smem>>
    %57 = arith.index_cast %56 : i32 to index
    %c0_42 = arith.constant 0 : index
    %58 = vector.load %arg1[%57, %c0_42] : memref<1000x64xf32, #tpu.memory_space<vmem>>, vector<1x64xf32>
    %c14_43 = arith.constant 14 : index
    %c0_44 = arith.constant 0 : index
    %59 = vector.load %arg17[%c14_43, %c0_44] : memref<16x64xf32, #tpu.memory_space<vmem>>, vector<1x64xf32>
    tpu.vector_store %arg17[%c14_43, %c0_44], %58 {strides = array<i32>} : memref<16x64xf32, #tpu.memory_space<vmem>>, vector<1x64xf32>,
    %c15 = arith.constant 15 : index
    %60 = memref.load %arg0[%c15] : memref<16xi32, #tpu.memory_space<smem>>
    %61 = arith.index_cast %60 : i32 to index
    %c0_45 = arith.constant 0 : index
    %62 = vector.load %arg1[%61, %c0_45] : memref<1000x64xf32, #tpu.memory_space<vmem>>, vector<1x64xf32>
    %c15_46 = arith.constant 15 : index
    %c0_47 = arith.constant 0 : index
    %63 = vector.load %arg17[%c15_46, %c0_47] : memref<16x64xf32, #tpu.memory_space<vmem>>, vector<1x64xf32>
    tpu.vector_store %arg17[%c15_46, %c0_47], %62 {strides = array<i32>} : memref<16x64xf32, #tpu.memory_space<vmem>>, vector<1x64xf32>,
    %c0_48 = arith.constant 0 : index
    %c0_49 = arith.constant 0 : index
    %64 = vector.load %arg17[%c0_48, %c0_49] : memref<16x64xf32, #tpu.memory_space<vmem>>, vector<16x64xf32>
    %65 = tpu.iota {dimensions = array<i32: 0>} : vector<16x16xi32>
    %66 = arith.sitofp %65 : vector<16x16xi32> to vector<16x16xf32>
    %67 = tpu.iota {dimensions = array<i32: 1>} : vector<16x16xi32>
    %68 = arith.sitofp %67 : vector<16x16xi32> to vector<16x16xf32>
    %cst = arith.constant 2.000000e+00 : f32
    %69 = vector.broadcast %cst : f32 to vector<16x16xf32>
    %70 = arith.divf %66, %69 : vector<16x16xf32>
    %71 = math.floor %70 : vector<16x16xf32>
    %cst_50 = arith.constant 2.000000e+00 : f32
    %72 = vector.broadcast %cst_50 : f32 to vector<16x16xf32>
    %73 = arith.mulf %72, %71 : vector<16x16xf32>
    %74 = arith.subf %66, %73 : vector<16x16xf32>
    %cst_51 = arith.constant 2.000000e+00 : f32
    %75 = vector.broadcast %cst_51 : f32 to vector<16x16xf32>
    %76 = arith.divf %68, %75 : vector<16x16xf32>
    %77 = math.floor %76 : vector<16x16xf32>
    %cst_52 = arith.constant 2.000000e+00 : f32
    %78 = vector.broadcast %cst_52 : f32 to vector<16x16xf32>
    %79 = arith.mulf %78, %77 : vector<16x16xf32>
    %80 = arith.subf %68, %79 : vector<16x16xf32>
    %81 = arith.cmpf oeq, %74, %80 : vector<16x16xf32>
    %cst_53 = arith.constant 0.000000e+00 : f32
    %cst_54 = arith.constant -1.000000e+30 : f32
    %82 = vector.broadcast %cst_53 : f32 to vector<16x16xf32>
    %83 = vector.broadcast %cst_54 : f32 to vector<16x16xf32>
    %84 = arith.select %81, %82, %83 : vector<16x16xi1>, vector<16x16xf32>
    %c0_55 = arith.constant 0 : index
    %c0_56 = arith.constant 0 : index
    %c0_57 = arith.constant 0 : index
    %85 = vector.load %arg2[%c0_55, %c0_56, %c0_57] : memref<2x64x192xbf16, #tpu.memory_space<vmem>>, vector<1x64x192xbf16>
    %86 = vector.shape_cast %85 : vector<1x64x192xbf16> to vector<64x192xbf16>
    %87 = arith.truncf %64 : vector<16x64xf32> to vector<16x64xbf16>
    %cst_58 = arith.constant dense<0.000000e+00> : vector<16x192xf32>
    %88 = tpu.matmul %87, %86, %cst_58 {dimension_numbers = #tpu.dot_dimension_numbers<[1], [0], [0], [1], [0, 0, 1, 1], [], []>} : vector<16x64xbf16>, vector<64x192xbf16>, vector<16x192xf32> -> vector<16x192xf32>
    %c0_59 = arith.constant 0 : index
    %c0_60 = arith.constant 0 : index
    %c0_61 = arith.constant 0 : index
    %89 = vector.load %arg3[%c0_59, %c0_60, %c0_61] : memref<2x1x192xf32, #tpu.memory_space<vmem>>, vector<1x1x192xf32>
    %90 = vector.shape_cast %89 : vector<1x1x192xf32> to vector<1x192xf32>
    %91 = vector.broadcast %90 : vector<1x192xf32> to vector<16x192xf32>
    %92 = arith.addf %88, %91 : vector<16x192xf32>
    %c0_62 = arith.constant 0 : index
    %c0_63 = arith.constant 0 : index
    %c0_64 = arith.constant 0 : index
    %93 = vector.load %arg4[%c0_62, %c0_63, %c0_64] : memref<2x64x64xbf16, #tpu.memory_space<vmem>>, vector<1x64x64xbf16>
    %94 = vector.shape_cast %93 : vector<1x64x64xbf16> to vector<64x64xbf16>
    %95 = vector.extract_strided_slice %92 {offsets = [0, 0], sizes = [16, 16], strides = [1, 1]} : vector<16x192xf32> to vector<16x16xf32>
    %96 = arith.truncf %95 : vector<16x16xf32> to vector<16x16xbf16>
    %97 = vector.extract_strided_slice %92 {offsets = [0, 64], sizes = [16, 16], strides = [1, 1]} : vector<16x192xf32> to vector<16x16xf32>
    %98 = arith.truncf %97 : vector<16x16xf32> to vector<16x16xbf16>
    %99 = vector.extract_strided_slice %92 {offsets = [0, 128], sizes = [16, 16], strides = [1, 1]} : vector<16x192xf32> to vector<16x16xf32>
    %100 = arith.truncf %99 : vector<16x16xf32> to vector<16x16xbf16>
    %cst_65 = arith.constant dense<0.000000e+00> : vector<16x16xf32>
    %101 = tpu.matmul %96, %98, %cst_65 {dimension_numbers = #tpu.dot_dimension_numbers<[1], [1], [0], [0], [0, 0, 1, 0], [], []>} : vector<16x16xbf16>, vector<16x16xbf16>, vector<16x16xf32> -> vector<16x16xf32>
    %102 = arith.addf %101, %84 : vector<16x16xf32>
    %cst_66 = arith.constant dense<0xFF800000> : vector<16xf32>
    %103 = vector.multi_reduction <maximumf>, %102, %cst_66 [1] : vector<16x16xf32> to vector<16xf32>
    %104 = vector.shape_cast %103 : vector<16xf32> to vector<16x1xf32>
    %105 = vector.broadcast %104 : vector<16x1xf32> to vector<16x16xf32>
    %106 = arith.subf %102, %105 : vector<16x16xf32>
    %107 = math.exp %106 : vector<16x16xf32>
    %cst_67 = arith.constant dense<0.000000e+00> : vector<16xf32>
    %108 = vector.multi_reduction <add>, %107, %cst_67 [1] : vector<16x16xf32> to vector<16xf32>
    %109 = vector.shape_cast %108 : vector<16xf32> to vector<16x1xf32>
    %110 = tpu.reciprocal %109 {approx = true} : vector<16x1xf32> -> vector<16x1xf32>
    %111 = vector.broadcast %110 : vector<16x1xf32> to vector<16x16xf32>
    %112 = arith.mulf %107, %111 : vector<16x16xf32>
    %113 = arith.truncf %112 : vector<16x16xf32> to vector<16x16xbf16>
    %cst_68 = arith.constant dense<0.000000e+00> : vector<16x16xf32>
    %114 = tpu.matmul %113, %100, %cst_68 {dimension_numbers = #tpu.dot_dimension_numbers<[1], [0], [0], [1], [0, 0, 1, 1], [], []>} : vector<16x16xbf16>, vector<16x16xbf16>, vector<16x16xf32> -> vector<16x16xf32>
    %115 = arith.truncf %114 : vector<16x16xf32> to vector<16x16xbf16>
    %116 = vector.extract_strided_slice %94 {offsets = [0, 0], sizes = [16, 64], strides = [1, 1]} : vector<64x64xbf16> to vector<16x64xbf16>
    %cst_69 = arith.constant dense<0.000000e+00> : vector<16x64xf32>
    %117 = tpu.matmul %115, %116, %cst_69 {dimension_numbers = #tpu.dot_dimension_numbers<[1], [0], [0], [1], [0, 0, 1, 1], [], []>} : vector<16x16xbf16>, vector<16x64xbf16>, vector<16x64xf32> -> vector<16x64xf32>
    %118 = vector.extract_strided_slice %92 {offsets = [0, 16], sizes = [16, 16], strides = [1, 1]} : vector<16x192xf32> to vector<16x16xf32>
    %119 = arith.truncf %118 : vector<16x16xf32> to vector<16x16xbf16>
    %120 = vector.extract_strided_slice %92 {offsets = [0, 80], sizes = [16, 16], strides = [1, 1]} : vector<16x192xf32> to vector<16x16xf32>
    %121 = arith.truncf %120 : vector<16x16xf32> to vector<16x16xbf16>
    %122 = vector.extract_strided_slice %92 {offsets = [0, 144], sizes = [16, 16], strides = [1, 1]} : vector<16x192xf32> to vector<16x16xf32>
    %123 = arith.truncf %122 : vector<16x16xf32> to vector<16x16xbf16>
    %cst_70 = arith.constant dense<0.000000e+00> : vector<16x16xf32>
    %124 = tpu.matmul %119, %121, %cst_70 {dimension_numbers = #tpu.dot_dimension_numbers<[1], [1], [0], [0], [0, 0, 1, 0], [], []>} : vector<16x16xbf16>, vector<16x16xbf16>, vector<16x16xf32> -> vector<16x16xf32>
    %125 = arith.addf %124, %84 : vector<16x16xf32>
    %cst_71 = arith.constant dense<0xFF800000> : vector<16xf32>
    %126 = vector.multi_reduction <maximumf>, %125, %cst_71 [1] : vector<16x16xf32> to vector<16xf32>
    %127 = vector.shape_cast %126 : vector<16xf32> to vector<16x1xf32>
    %128 = vector.broadcast %127 : vector<16x1xf32> to vector<16x16xf32>
    %129 = arith.subf %125, %128 : vector<16x16xf32>
    %130 = math.exp %129 : vector<16x16xf32>
    %cst_72 = arith.constant dense<0.000000e+00> : vector<16xf32>
    %131 = vector.multi_reduction <add>, %130, %cst_72 [1] : vector<16x16xf32> to vector<16xf32>
    %132 = vector.shape_cast %131 : vector<16xf32> to vector<16x1xf32>
    %133 = tpu.reciprocal %132 {approx = true} : vector<16x1xf32> -> vector<16x1xf32>
    %134 = vector.broadcast %133 : vector<16x1xf32> to vector<16x16xf32>
    %135 = arith.mulf %130, %134 : vector<16x16xf32>
    %136 = arith.truncf %135 : vector<16x16xf32> to vector<16x16xbf16>
    %cst_73 = arith.constant dense<0.000000e+00> : vector<16x16xf32>
    %137 = tpu.matmul %136, %123, %cst_73 {dimension_numbers = #tpu.dot_dimension_numbers<[1], [0], [0], [1], [0, 0, 1, 1], [], []>} : vector<16x16xbf16>, vector<16x16xbf16>, vector<16x16xf32> -> vector<16x16xf32>
    %138 = arith.truncf %137 : vector<16x16xf32> to vector<16x16xbf16>
    %139 = vector.extract_strided_slice %94 {offsets = [16, 0], sizes = [16, 64], strides = [1, 1]} : vector<64x64xbf16> to vector<16x64xbf16>
    %cst_74 = arith.constant dense<0.000000e+00> : vector<16x64xf32>
    %140 = tpu.matmul %138, %139, %cst_74 {dimension_numbers = #tpu.dot_dimension_numbers<[1], [0], [0], [1], [0, 0, 1, 1], [], []>} : vector<16x16xbf16>, vector<16x64xbf16>, vector<16x64xf32> -> vector<16x64xf32>
    %141 = arith.addf %117, %140 : vector<16x64xf32>
    %142 = vector.extract_strided_slice %92 {offsets = [0, 32], sizes = [16, 16], strides = [1, 1]} : vector<16x192xf32> to vector<16x16xf32>
    %143 = arith.truncf %142 : vector<16x16xf32> to vector<16x16xbf16>
    %144 = vector.extract_strided_slice %92 {offsets = [0, 96], sizes = [16, 16], strides = [1, 1]} : vector<16x192xf32> to vector<16x16xf32>
    %145 = arith.truncf %144 : vector<16x16xf32> to vector<16x16xbf16>
    %146 = vector.extract_strided_slice %92 {offsets = [0, 160], sizes = [16, 16], strides = [1, 1]} : vector<16x192xf32> to vector<16x16xf32>
    %147 = arith.truncf %146 : vector<16x16xf32> to vector<16x16xbf16>
    %cst_75 = arith.constant dense<0.000000e+00> : vector<16x16xf32>
    %148 = tpu.matmul %143, %145, %cst_75 {dimension_numbers = #tpu.dot_dimension_numbers<[1], [1], [0], [0], [0, 0, 1, 0], [], []>} : vector<16x16xbf16>, vector<16x16xbf16>, vector<16x16xf32> -> vector<16x16xf32>
    %149 = arith.addf %148, %84 : vector<16x16xf32>
    %cst_76 = arith.constant dense<0xFF800000> : vector<16xf32>
    %150 = vector.multi_reduction <maximumf>, %149, %cst_76 [1] : vector<16x16xf32> to vector<16xf32>
    %151 = vector.shape_cast %150 : vector<16xf32> to vector<16x1xf32>
    %152 = vector.broadcast %151 : vector<16x1xf32> to vector<16x16xf32>
    %153 = arith.subf %149, %152 : vector<16x16xf32>
    %154 = math.exp %153 : vector<16x16xf32>
    %cst_77 = arith.constant dense<0.000000e+00> : vector<16xf32>
    %155 = vector.multi_reduction <add>, %154, %cst_77 [1] : vector<16x16xf32> to vector<16xf32>
    %156 = vector.shape_cast %155 : vector<16xf32> to vector<16x1xf32>
    %157 = tpu.reciprocal %156 {approx = true} : vector<16x1xf32> -> vector<16x1xf32>
    %158 = vector.broadcast %157 : vector<16x1xf32> to vector<16x16xf32>
    %159 = arith.mulf %154, %158 : vector<16x16xf32>
    %160 = arith.truncf %159 : vector<16x16xf32> to vector<16x16xbf16>
    %cst_78 = arith.constant dense<0.000000e+00> : vector<16x16xf32>
    %161 = tpu.matmul %160, %147, %cst_78 {dimension_numbers = #tpu.dot_dimension_numbers<[1], [0], [0], [1], [0, 0, 1, 1], [], []>} : vector<16x16xbf16>, vector<16x16xbf16>, vector<16x16xf32> -> vector<16x16xf32>
    %162 = arith.truncf %161 : vector<16x16xf32> to vector<16x16xbf16>
    %163 = vector.extract_strided_slice %94 {offsets = [32, 0], sizes = [16, 64], strides = [1, 1]} : vector<64x64xbf16> to vector<16x64xbf16>
    %cst_79 = arith.constant dense<0.000000e+00> : vector<16x64xf32>
    %164 = tpu.matmul %162, %163, %cst_79 {dimension_numbers = #tpu.dot_dimension_numbers<[1], [0], [0], [1], [0, 0, 1, 1], [], []>} : vector<16x16xbf16>, vector<16x64xbf16>, vector<16x64xf32> -> vector<16x64xf32>
    %165 = arith.addf %141, %164 : vector<16x64xf32>
    %166 = vector.extract_strided_slice %92 {offsets = [0, 48], sizes = [16, 16], strides = [1, 1]} : vector<16x192xf32> to vector<16x16xf32>
    %167 = arith.truncf %166 : vector<16x16xf32> to vector<16x16xbf16>
    %168 = vector.extract_strided_slice %92 {offsets = [0, 112], sizes = [16, 16], strides = [1, 1]} : vector<16x192xf32> to vector<16x16xf32>
    %169 = arith.truncf %168 : vector<16x16xf32> to vector<16x16xbf16>
    %170 = vector.extract_strided_slice %92 {offsets = [0, 176], sizes = [16, 16], strides = [1, 1]} : vector<16x192xf32> to vector<16x16xf32>
    %171 = arith.truncf %170 : vector<16x16xf32> to vector<16x16xbf16>
    %cst_80 = arith.constant dense<0.000000e+00> : vector<16x16xf32>
    %172 = tpu.matmul %167, %169, %cst_80 {dimension_numbers = #tpu.dot_dimension_numbers<[1], [1], [0], [0], [0, 0, 1, 0], [], []>} : vector<16x16xbf16>, vector<16x16xbf16>, vector<16x16xf32> -> vector<16x16xf32>
    %173 = arith.addf %172, %84 : vector<16x16xf32>
    %cst_81 = arith.constant dense<0xFF800000> : vector<16xf32>
    %174 = vector.multi_reduction <maximumf>, %173, %cst_81 [1] : vector<16x16xf32> to vector<16xf32>
    %175 = vector.shape_cast %174 : vector<16xf32> to vector<16x1xf32>
    %176 = vector.broadcast %175 : vector<16x1xf32> to vector<16x16xf32>
    %177 = arith.subf %173, %176 : vector<16x16xf32>
    %178 = math.exp %177 : vector<16x16xf32>
    %cst_82 = arith.constant dense<0.000000e+00> : vector<16xf32>
    %179 = vector.multi_reduction <add>, %178, %cst_82 [1] : vector<16x16xf32> to vector<16xf32>
    %180 = vector.shape_cast %179 : vector<16xf32> to vector<16x1xf32>
    %181 = tpu.reciprocal %180 {approx = true} : vector<16x1xf32> -> vector<16x1xf32>
    %182 = vector.broadcast %181 : vector<16x1xf32> to vector<16x16xf32>
    %183 = arith.mulf %178, %182 : vector<16x16xf32>
    %184 = arith.truncf %183 : vector<16x16xf32> to vector<16x16xbf16>
    %cst_83 = arith.constant dense<0.000000e+00> : vector<16x16xf32>
    %185 = tpu.matmul %184, %171, %cst_83 {dimension_numbers = #tpu.dot_dimension_numbers<[1], [0], [0], [1], [0, 0, 1, 1], [], []>} : vector<16x16xbf16>, vector<16x16xbf16>, vector<16x16xf32> -> vector<16x16xf32>
    %186 = arith.truncf %185 : vector<16x16xf32> to vector<16x16xbf16>
    %187 = vector.extract_strided_slice %94 {offsets = [48, 0], sizes = [16, 64], strides = [1, 1]} : vector<64x64xbf16> to vector<16x64xbf16>
    %cst_84 = arith.constant dense<0.000000e+00> : vector<16x64xf32>
    %188 = tpu.matmul %186, %187, %cst_84 {dimension_numbers = #tpu.dot_dimension_numbers<[1], [0], [0], [1], [0, 0, 1, 1], [], []>} : vector<16x16xbf16>, vector<16x64xbf16>, vector<16x64xf32> -> vector<16x64xf32>
    %189 = arith.addf %165, %188 : vector<16x64xf32>
    %c0_85 = arith.constant 0 : index
    %c0_86 = arith.constant 0 : index
    %c0_87 = arith.constant 0 : index
    %190 = vector.load %arg5[%c0_85, %c0_86, %c0_87] : memref<2x1x64xf32, #tpu.memory_space<vmem>>, vector<1x1x64xf32>
    %191 = vector.shape_cast %190 : vector<1x1x64xf32> to vector<1x64xf32>
    %192 = vector.broadcast %191 : vector<1x64xf32> to vector<16x64xf32>
    %193 = arith.addf %189, %192 : vector<16x64xf32>
    %194 = arith.addf %64, %193 : vector<16x64xf32>
    %c0_88 = arith.constant 0 : index
    %c0_89 = arith.constant 0 : index
    %c0_90 = arith.constant 0 : index
    %195 = vector.load %arg6[%c0_88, %c0_89, %c0_90] : memref<2x1x64xf32, #tpu.memory_space<vmem>>, vector<1x1x64xf32>
    %196 = vector.shape_cast %195 : vector<1x1x64xf32> to vector<1x64xf32>
    %c0_91 = arith.constant 0 : index
    %c0_92 = arith.constant 0 : index
    %c0_93 = arith.constant 0 : index
    %197 = vector.load %arg7[%c0_91, %c0_92, %c0_93] : memref<2x1x64xf32, #tpu.memory_space<vmem>>, vector<1x1x64xf32>
    %198 = vector.shape_cast %197 : vector<1x1x64xf32> to vector<1x64xf32>
    %cst_94 = arith.constant dense<0.000000e+00> : vector<16xf32>
    %199 = vector.multi_reduction <add>, %194, %cst_94 [1] : vector<16x64xf32> to vector<16xf32>
    %200 = vector.shape_cast %199 : vector<16xf32> to vector<16x1xf32>
    %cst_95 = arith.constant 6.400000e+01 : f32
    %201 = vector.broadcast %cst_95 : f32 to vector<16x1xf32>
    %202 = arith.divf %200, %201 : vector<16x1xf32>
    %203 = arith.mulf %194, %194 : vector<16x64xf32>
    %cst_96 = arith.constant dense<0.000000e+00> : vector<16xf32>
    %204 = vector.multi_reduction <add>, %203, %cst_96 [1] : vector<16x64xf32> to vector<16xf32>
    %205 = vector.shape_cast %204 : vector<16xf32> to vector<16x1xf32>
    %cst_97 = arith.constant 6.400000e+01 : f32
    %206 = vector.broadcast %cst_97 : f32 to vector<16x1xf32>
    %207 = arith.divf %205, %206 : vector<16x1xf32>
    %208 = arith.mulf %202, %202 : vector<16x1xf32>
    %209 = arith.subf %207, %208 : vector<16x1xf32>
    %210 = vector.broadcast %202 : vector<16x1xf32> to vector<16x64xf32>
    %211 = arith.subf %194, %210 : vector<16x64xf32>
    %cst_98 = arith.constant 9.99999974E-6 : f32
    %212 = vector.broadcast %cst_98 : f32 to vector<16x1xf32>
    %213 = arith.addf %209, %212 : vector<16x1xf32>
    %214 = math.rsqrt %213 : vector<16x1xf32>
    %215 = vector.broadcast %214 : vector<16x1xf32> to vector<16x64xf32>
    %216 = arith.mulf %211, %215 : vector<16x64xf32>
    %217 = vector.broadcast %196 : vector<1x64xf32> to vector<16x64xf32>
    %218 = arith.mulf %216, %217 : vector<16x64xf32>
    %219 = vector.broadcast %198 : vector<1x64xf32> to vector<16x64xf32>
    %220 = arith.addf %218, %219 : vector<16x64xf32>
    %c0_99 = arith.constant 0 : index
    %c0_100 = arith.constant 0 : index
    %c0_101 = arith.constant 0 : index
    %221 = vector.load %arg8[%c0_99, %c0_100, %c0_101] : memref<2x64x128xbf16, #tpu.memory_space<vmem>>, vector<1x64x128xbf16>
    %222 = vector.shape_cast %221 : vector<1x64x128xbf16> to vector<64x128xbf16>
    %223 = arith.truncf %220 : vector<16x64xf32> to vector<16x64xbf16>
    %cst_102 = arith.constant dense<0.000000e+00> : vector<16x128xf32>
    %224 = tpu.matmul %223, %222, %cst_102 {dimension_numbers = #tpu.dot_dimension_numbers<[1], [0], [0], [1], [0, 0, 1, 1], [], []>} : vector<16x64xbf16>, vector<64x128xbf16>, vector<16x128xf32> -> vector<16x128xf32>
    %c0_103 = arith.constant 0 : index
    %c0_104 = arith.constant 0 : index
    %c0_105 = arith.constant 0 : index
    %225 = vector.load %arg9[%c0_103, %c0_104, %c0_105] : memref<2x1x128xf32, #tpu.memory_space<vmem>>, vector<1x1x128xf32>
    %226 = vector.shape_cast %225 : vector<1x1x128xf32> to vector<1x128xf32>
    %227 = vector.broadcast %226 : vector<1x128xf32> to vector<16x128xf32>
    %228 = arith.addf %224, %227 : vector<16x128xf32>
    %cst_106 = arith.constant 0.000000e+00 : f32
    %229 = vector.broadcast %cst_106 : f32 to vector<16x128xf32>
    %230 = arith.maximumf %228, %229 : vector<16x128xf32>
    %c0_107 = arith.constant 0 : index
    %c0_108 = arith.constant 0 : index
    %c0_109 = arith.constant 0 : index
    %231 = vector.load %arg10[%c0_107, %c0_108, %c0_109] : memref<2x128x64xbf16, #tpu.memory_space<vmem>>, vector<1x128x64xbf16>
    %232 = vector.shape_cast %231 : vector<1x128x64xbf16> to vector<128x64xbf16>
    %233 = arith.truncf %230 : vector<16x128xf32> to vector<16x128xbf16>
    %cst_110 = arith.constant dense<0.000000e+00> : vector<16x64xf32>
    %234 = tpu.matmul %233, %232, %cst_110 {dimension_numbers = #tpu.dot_dimension_numbers<[1], [0], [0], [1], [0, 0, 1, 1], [], []>} : vector<16x128xbf16>, vector<128x64xbf16>, vector<16x64xf32> -> vector<16x64xf32>
    %c0_111 = arith.constant 0 : index
    %c0_112 = arith.constant 0 : index
    %c0_113 = arith.constant 0 : index
    %235 = vector.load %arg11[%c0_111, %c0_112, %c0_113] : memref<2x1x64xf32, #tpu.memory_space<vmem>>, vector<1x1x64xf32>
    %236 = vector.shape_cast %235 : vector<1x1x64xf32> to vector<1x64xf32>
    %237 = vector.broadcast %236 : vector<1x64xf32> to vector<16x64xf32>
    %238 = arith.addf %234, %237 : vector<16x64xf32>
    %239 = arith.addf %220, %238 : vector<16x64xf32>
    %c0_114 = arith.constant 0 : index
    %c0_115 = arith.constant 0 : index
    %c0_116 = arith.constant 0 : index
    %240 = vector.load %arg12[%c0_114, %c0_115, %c0_116] : memref<2x1x64xf32, #tpu.memory_space<vmem>>, vector<1x1x64xf32>
    %241 = vector.shape_cast %240 : vector<1x1x64xf32> to vector<1x64xf32>
    %c0_117 = arith.constant 0 : index
    %c0_118 = arith.constant 0 : index
    %c0_119 = arith.constant 0 : index
    %242 = vector.load %arg13[%c0_117, %c0_118, %c0_119] : memref<2x1x64xf32, #tpu.memory_space<vmem>>, vector<1x1x64xf32>
    %243 = vector.shape_cast %242 : vector<1x1x64xf32> to vector<1x64xf32>
    %cst_120 = arith.constant dense<0.000000e+00> : vector<16xf32>
    %244 = vector.multi_reduction <add>, %239, %cst_120 [1] : vector<16x64xf32> to vector<16xf32>
    %245 = vector.shape_cast %244 : vector<16xf32> to vector<16x1xf32>
    %cst_121 = arith.constant 6.400000e+01 : f32
    %246 = vector.broadcast %cst_121 : f32 to vector<16x1xf32>
    %247 = arith.divf %245, %246 : vector<16x1xf32>
    %248 = arith.mulf %239, %239 : vector<16x64xf32>
    %cst_122 = arith.constant dense<0.000000e+00> : vector<16xf32>
    %249 = vector.multi_reduction <add>, %248, %cst_122 [1] : vector<16x64xf32> to vector<16xf32>
    %250 = vector.shape_cast %249 : vector<16xf32> to vector<16x1xf32>
    %cst_123 = arith.constant 6.400000e+01 : f32
    %251 = vector.broadcast %cst_123 : f32 to vector<16x1xf32>
    %252 = arith.divf %250, %251 : vector<16x1xf32>
    %253 = arith.mulf %247, %247 : vector<16x1xf32>
    %254 = arith.subf %252, %253 : vector<16x1xf32>
    %255 = vector.broadcast %247 : vector<16x1xf32> to vector<16x64xf32>
    %256 = arith.subf %239, %255 : vector<16x64xf32>
    %cst_124 = arith.constant 9.99999974E-6 : f32
    %257 = vector.broadcast %cst_124 : f32 to vector<16x1xf32>
    %258 = arith.addf %254, %257 : vector<16x1xf32>
    %259 = math.rsqrt %258 : vector<16x1xf32>
    %260 = vector.broadcast %259 : vector<16x1xf32> to vector<16x64xf32>
    %261 = arith.mulf %256, %260 : vector<16x64xf32>
    %262 = vector.broadcast %241 : vector<1x64xf32> to vector<16x64xf32>
    %263 = arith.mulf %261, %262 : vector<16x64xf32>
    %264 = vector.broadcast %243 : vector<1x64xf32> to vector<16x64xf32>
    %265 = arith.addf %263, %264 : vector<16x64xf32>
    %c1_125 = arith.constant 1 : index
    %c0_126 = arith.constant 0 : index
    %c0_127 = arith.constant 0 : index
    %266 = vector.load %arg2[%c1_125, %c0_126, %c0_127] : memref<2x64x192xbf16, #tpu.memory_space<vmem>>, vector<1x64x192xbf16>
    %267 = vector.shape_cast %266 : vector<1x64x192xbf16> to vector<64x192xbf16>
    %268 = arith.truncf %265 : vector<16x64xf32> to vector<16x64xbf16>
    %cst_128 = arith.constant dense<0.000000e+00> : vector<16x192xf32>
    %269 = tpu.matmul %268, %267, %cst_128 {dimension_numbers = #tpu.dot_dimension_numbers<[1], [0], [0], [1], [0, 0, 1, 1], [], []>} : vector<16x64xbf16>, vector<64x192xbf16>, vector<16x192xf32> -> vector<16x192xf32>
    %c1_129 = arith.constant 1 : index
    %c0_130 = arith.constant 0 : index
    %c0_131 = arith.constant 0 : index
    %270 = vector.load %arg3[%c1_129, %c0_130, %c0_131] : memref<2x1x192xf32, #tpu.memory_space<vmem>>, vector<1x1x192xf32>
    %271 = vector.shape_cast %270 : vector<1x1x192xf32> to vector<1x192xf32>
    %272 = vector.broadcast %271 : vector<1x192xf32> to vector<16x192xf32>
    %273 = arith.addf %269, %272 : vector<16x192xf32>
    %c1_132 = arith.constant 1 : index
    %c0_133 = arith.constant 0 : index
    %c0_134 = arith.constant 0 : index
    %274 = vector.load %arg4[%c1_132, %c0_133, %c0_134] : memref<2x64x64xbf16, #tpu.memory_space<vmem>>, vector<1x64x64xbf16>
    %275 = vector.shape_cast %274 : vector<1x64x64xbf16> to vector<64x64xbf16>
    %276 = vector.extract_strided_slice %273 {offsets = [0, 0], sizes = [16, 16], strides = [1, 1]} : vector<16x192xf32> to vector<16x16xf32>
    %277 = arith.truncf %276 : vector<16x16xf32> to vector<16x16xbf16>
    %278 = vector.extract_strided_slice %273 {offsets = [0, 64], sizes = [16, 16], strides = [1, 1]} : vector<16x192xf32> to vector<16x16xf32>
    %279 = arith.truncf %278 : vector<16x16xf32> to vector<16x16xbf16>
    %280 = vector.extract_strided_slice %273 {offsets = [0, 128], sizes = [16, 16], strides = [1, 1]} : vector<16x192xf32> to vector<16x16xf32>
    %281 = arith.truncf %280 : vector<16x16xf32> to vector<16x16xbf16>
    %cst_135 = arith.constant dense<0.000000e+00> : vector<16x16xf32>
    %282 = tpu.matmul %277, %279, %cst_135 {dimension_numbers = #tpu.dot_dimension_numbers<[1], [1], [0], [0], [0, 0, 1, 0], [], []>} : vector<16x16xbf16>, vector<16x16xbf16>, vector<16x16xf32> -> vector<16x16xf32>
    %283 = arith.addf %282, %84 : vector<16x16xf32>
    %cst_136 = arith.constant dense<0xFF800000> : vector<16xf32>
    %284 = vector.multi_reduction <maximumf>, %283, %cst_136 [1] : vector<16x16xf32> to vector<16xf32>
    %285 = vector.shape_cast %284 : vector<16xf32> to vector<16x1xf32>
    %286 = vector.broadcast %285 : vector<16x1xf32> to vector<16x16xf32>
    %287 = arith.subf %283, %286 : vector<16x16xf32>
    %288 = math.exp %287 : vector<16x16xf32>
    %cst_137 = arith.constant dense<0.000000e+00> : vector<16xf32>
    %289 = vector.multi_reduction <add>, %288, %cst_137 [1] : vector<16x16xf32> to vector<16xf32>
    %290 = vector.shape_cast %289 : vector<16xf32> to vector<16x1xf32>
    %291 = tpu.reciprocal %290 {approx = true} : vector<16x1xf32> -> vector<16x1xf32>
    %292 = vector.broadcast %291 : vector<16x1xf32> to vector<16x16xf32>
    %293 = arith.mulf %288, %292 : vector<16x16xf32>
    %294 = arith.truncf %293 : vector<16x16xf32> to vector<16x16xbf16>
    %cst_138 = arith.constant dense<0.000000e+00> : vector<16x16xf32>
    %295 = tpu.matmul %294, %281, %cst_138 {dimension_numbers = #tpu.dot_dimension_numbers<[1], [0], [0], [1], [0, 0, 1, 1], [], []>} : vector<16x16xbf16>, vector<16x16xbf16>, vector<16x16xf32> -> vector<16x16xf32>
    %296 = arith.truncf %295 : vector<16x16xf32> to vector<16x16xbf16>
    %297 = vector.extract_strided_slice %275 {offsets = [0, 0], sizes = [16, 64], strides = [1, 1]} : vector<64x64xbf16> to vector<16x64xbf16>
    %cst_139 = arith.constant dense<0.000000e+00> : vector<16x64xf32>
    %298 = tpu.matmul %296, %297, %cst_139 {dimension_numbers = #tpu.dot_dimension_numbers<[1], [0], [0], [1], [0, 0, 1, 1], [], []>} : vector<16x16xbf16>, vector<16x64xbf16>, vector<16x64xf32> -> vector<16x64xf32>
    %299 = vector.extract_strided_slice %273 {offsets = [0, 16], sizes = [16, 16], strides = [1, 1]} : vector<16x192xf32> to vector<16x16xf32>
    %300 = arith.truncf %299 : vector<16x16xf32> to vector<16x16xbf16>
    %301 = vector.extract_strided_slice %273 {offsets = [0, 80], sizes = [16, 16], strides = [1, 1]} : vector<16x192xf32> to vector<16x16xf32>
    %302 = arith.truncf %301 : vector<16x16xf32> to vector<16x16xbf16>
    %303 = vector.extract_strided_slice %273 {offsets = [0, 144], sizes = [16, 16], strides = [1, 1]} : vector<16x192xf32> to vector<16x16xf32>
    %304 = arith.truncf %303 : vector<16x16xf32> to vector<16x16xbf16>
    %cst_140 = arith.constant dense<0.000000e+00> : vector<16x16xf32>
    %305 = tpu.matmul %300, %302, %cst_140 {dimension_numbers = #tpu.dot_dimension_numbers<[1], [1], [0], [0], [0, 0, 1, 0], [], []>} : vector<16x16xbf16>, vector<16x16xbf16>, vector<16x16xf32> -> vector<16x16xf32>
    %306 = arith.addf %305, %84 : vector<16x16xf32>
    %cst_141 = arith.constant dense<0xFF800000> : vector<16xf32>
    %307 = vector.multi_reduction <maximumf>, %306, %cst_141 [1] : vector<16x16xf32> to vector<16xf32>
    %308 = vector.shape_cast %307 : vector<16xf32> to vector<16x1xf32>
    %309 = vector.broadcast %308 : vector<16x1xf32> to vector<16x16xf32>
    %310 = arith.subf %306, %309 : vector<16x16xf32>
    %311 = math.exp %310 : vector<16x16xf32>
    %cst_142 = arith.constant dense<0.000000e+00> : vector<16xf32>
    %312 = vector.multi_reduction <add>, %311, %cst_142 [1] : vector<16x16xf32> to vector<16xf32>
    %313 = vector.shape_cast %312 : vector<16xf32> to vector<16x1xf32>
    %314 = tpu.reciprocal %313 {approx = true} : vector<16x1xf32> -> vector<16x1xf32>
    %315 = vector.broadcast %314 : vector<16x1xf32> to vector<16x16xf32>
    %316 = arith.mulf %311, %315 : vector<16x16xf32>
    %317 = arith.truncf %316 : vector<16x16xf32> to vector<16x16xbf16>
    %cst_143 = arith.constant dense<0.000000e+00> : vector<16x16xf32>
    %318 = tpu.matmul %317, %304, %cst_143 {dimension_numbers = #tpu.dot_dimension_numbers<[1], [0], [0], [1], [0, 0, 1, 1], [], []>} : vector<16x16xbf16>, vector<16x16xbf16>, vector<16x16xf32> -> vector<16x16xf32>
    %319 = arith.truncf %318 : vector<16x16xf32> to vector<16x16xbf16>
    %320 = vector.extract_strided_slice %275 {offsets = [16, 0], sizes = [16, 64], strides = [1, 1]} : vector<64x64xbf16> to vector<16x64xbf16>
    %cst_144 = arith.constant dense<0.000000e+00> : vector<16x64xf32>
    %321 = tpu.matmul %319, %320, %cst_144 {dimension_numbers = #tpu.dot_dimension_numbers<[1], [0], [0], [1], [0, 0, 1, 1], [], []>} : vector<16x16xbf16>, vector<16x64xbf16>, vector<16x64xf32> -> vector<16x64xf32>
    %322 = arith.addf %298, %321 : vector<16x64xf32>
    %323 = vector.extract_strided_slice %273 {offsets = [0, 32], sizes = [16, 16], strides = [1, 1]} : vector<16x192xf32> to vector<16x16xf32>
    %324 = arith.truncf %323 : vector<16x16xf32> to vector<16x16xbf16>
    %325 = vector.extract_strided_slice %273 {offsets = [0, 96], sizes = [16, 16], strides = [1, 1]} : vector<16x192xf32> to vector<16x16xf32>
    %326 = arith.truncf %325 : vector<16x16xf32> to vector<16x16xbf16>
    %327 = vector.extract_strided_slice %273 {offsets = [0, 160], sizes = [16, 16], strides = [1, 1]} : vector<16x192xf32> to vector<16x16xf32>
    %328 = arith.truncf %327 : vector<16x16xf32> to vector<16x16xbf16>
    %cst_145 = arith.constant dense<0.000000e+00> : vector<16x16xf32>
    %329 = tpu.matmul %324, %326, %cst_145 {dimension_numbers = #tpu.dot_dimension_numbers<[1], [1], [0], [0], [0, 0, 1, 0], [], []>} : vector<16x16xbf16>, vector<16x16xbf16>, vector<16x16xf32> -> vector<16x16xf32>
    %330 = arith.addf %329, %84 : vector<16x16xf32>
    %cst_146 = arith.constant dense<0xFF800000> : vector<16xf32>
    %331 = vector.multi_reduction <maximumf>, %330, %cst_146 [1] : vector<16x16xf32> to vector<16xf32>
    %332 = vector.shape_cast %331 : vector<16xf32> to vector<16x1xf32>
    %333 = vector.broadcast %332 : vector<16x1xf32> to vector<16x16xf32>
    %334 = arith.subf %330, %333 : vector<16x16xf32>
    %335 = math.exp %334 : vector<16x16xf32>
    %cst_147 = arith.constant dense<0.000000e+00> : vector<16xf32>
    %336 = vector.multi_reduction <add>, %335, %cst_147 [1] : vector<16x16xf32> to vector<16xf32>
    %337 = vector.shape_cast %336 : vector<16xf32> to vector<16x1xf32>
    %338 = tpu.reciprocal %337 {approx = true} : vector<16x1xf32> -> vector<16x1xf32>
    %339 = vector.broadcast %338 : vector<16x1xf32> to vector<16x16xf32>
    %340 = arith.mulf %335, %339 : vector<16x16xf32>
    %341 = arith.truncf %340 : vector<16x16xf32> to vector<16x16xbf16>
    %cst_148 = arith.constant dense<0.000000e+00> : vector<16x16xf32>
    %342 = tpu.matmul %341, %328, %cst_148 {dimension_numbers = #tpu.dot_dimension_numbers<[1], [0], [0], [1], [0, 0, 1, 1], [], []>} : vector<16x16xbf16>, vector<16x16xbf16>, vector<16x16xf32> -> vector<16x16xf32>
    %343 = arith.truncf %342 : vector<16x16xf32> to vector<16x16xbf16>
    %344 = vector.extract_strided_slice %275 {offsets = [32, 0], sizes = [16, 64], strides = [1, 1]} : vector<64x64xbf16> to vector<16x64xbf16>
    %cst_149 = arith.constant dense<0.000000e+00> : vector<16x64xf32>
    %345 = tpu.matmul %343, %344, %cst_149 {dimension_numbers = #tpu.dot_dimension_numbers<[1], [0], [0], [1], [0, 0, 1, 1], [], []>} : vector<16x16xbf16>, vector<16x64xbf16>, vector<16x64xf32> -> vector<16x64xf32>
    %346 = arith.addf %322, %345 : vector<16x64xf32>
    %347 = vector.extract_strided_slice %273 {offsets = [0, 48], sizes = [16, 16], strides = [1, 1]} : vector<16x192xf32> to vector<16x16xf32>
    %348 = arith.truncf %347 : vector<16x16xf32> to vector<16x16xbf16>
    %349 = vector.extract_strided_slice %273 {offsets = [0, 112], sizes = [16, 16], strides = [1, 1]} : vector<16x192xf32> to vector<16x16xf32>
    %350 = arith.truncf %349 : vector<16x16xf32> to vector<16x16xbf16>
    %351 = vector.extract_strided_slice %273 {offsets = [0, 176], sizes = [16, 16], strides = [1, 1]} : vector<16x192xf32> to vector<16x16xf32>
    %352 = arith.truncf %351 : vector<16x16xf32> to vector<16x16xbf16>
    %cst_150 = arith.constant dense<0.000000e+00> : vector<16x16xf32>
    %353 = tpu.matmul %348, %350, %cst_150 {dimension_numbers = #tpu.dot_dimension_numbers<[1], [1], [0], [0], [0, 0, 1, 0], [], []>} : vector<16x16xbf16>, vector<16x16xbf16>, vector<16x16xf32> -> vector<16x16xf32>
    %354 = arith.addf %353, %84 : vector<16x16xf32>
    %cst_151 = arith.constant dense<0xFF800000> : vector<16xf32>
    %355 = vector.multi_reduction <maximumf>, %354, %cst_151 [1] : vector<16x16xf32> to vector<16xf32>
    %356 = vector.shape_cast %355 : vector<16xf32> to vector<16x1xf32>
    %357 = vector.broadcast %356 : vector<16x1xf32> to vector<16x16xf32>
    %358 = arith.subf %354, %357 : vector<16x16xf32>
    %359 = math.exp %358 : vector<16x16xf32>
    %cst_152 = arith.constant dense<0.000000e+00> : vector<16xf32>
    %360 = vector.multi_reduction <add>, %359, %cst_152 [1] : vector<16x16xf32> to vector<16xf32>
    %361 = vector.shape_cast %360 : vector<16xf32> to vector<16x1xf32>
    %362 = tpu.reciprocal %361 {approx = true} : vector<16x1xf32> -> vector<16x1xf32>
    %363 = vector.broadcast %362 : vector<16x1xf32> to vector<16x16xf32>
    %364 = arith.mulf %359, %363 : vector<16x16xf32>
    %365 = arith.truncf %364 : vector<16x16xf32> to vector<16x16xbf16>
    %cst_153 = arith.constant dense<0.000000e+00> : vector<16x16xf32>
    %366 = tpu.matmul %365, %352, %cst_153 {dimension_numbers = #tpu.dot_dimension_numbers<[1], [0], [0], [1], [0, 0, 1, 1], [], []>} : vector<16x16xbf16>, vector<16x16xbf16>, vector<16x16xf32> -> vector<16x16xf32>
    %367 = arith.truncf %366 : vector<16x16xf32> to vector<16x16xbf16>
    %368 = vector.extract_strided_slice %275 {offsets = [48, 0], sizes = [16, 64], strides = [1, 1]} : vector<64x64xbf16> to vector<16x64xbf16>
    %cst_154 = arith.constant dense<0.000000e+00> : vector<16x64xf32>
    %369 = tpu.matmul %367, %368, %cst_154 {dimension_numbers = #tpu.dot_dimension_numbers<[1], [0], [0], [1], [0, 0, 1, 1], [], []>} : vector<16x16xbf16>, vector<16x64xbf16>, vector<16x64xf32> -> vector<16x64xf32>
    %370 = arith.addf %346, %369 : vector<16x64xf32>
    %c1_155 = arith.constant 1 : index
    %c0_156 = arith.constant 0 : index
    %c0_157 = arith.constant 0 : index
    %371 = vector.load %arg5[%c1_155, %c0_156, %c0_157] : memref<2x1x64xf32, #tpu.memory_space<vmem>>, vector<1x1x64xf32>
    %372 = vector.shape_cast %371 : vector<1x1x64xf32> to vector<1x64xf32>
    %373 = vector.broadcast %372 : vector<1x64xf32> to vector<16x64xf32>
    %374 = arith.addf %370, %373 : vector<16x64xf32>
    %375 = arith.addf %265, %374 : vector<16x64xf32>
    %c1_158 = arith.constant 1 : index
    %c0_159 = arith.constant 0 : index
    %c0_160 = arith.constant 0 : index
    %376 = vector.load %arg6[%c1_158, %c0_159, %c0_160] : memref<2x1x64xf32, #tpu.memory_space<vmem>>, vector<1x1x64xf32>
    %377 = vector.shape_cast %376 : vector<1x1x64xf32> to vector<1x64xf32>
    %c1_161 = arith.constant 1 : index
    %c0_162 = arith.constant 0 : index
    %c0_163 = arith.constant 0 : index
    %378 = vector.load %arg7[%c1_161, %c0_162, %c0_163] : memref<2x1x64xf32, #tpu.memory_space<vmem>>, vector<1x1x64xf32>
    %379 = vector.shape_cast %378 : vector<1x1x64xf32> to vector<1x64xf32>
    %cst_164 = arith.constant dense<0.000000e+00> : vector<16xf32>
    %380 = vector.multi_reduction <add>, %375, %cst_164 [1] : vector<16x64xf32> to vector<16xf32>
    %381 = vector.shape_cast %380 : vector<16xf32> to vector<16x1xf32>
    %cst_165 = arith.constant 6.400000e+01 : f32
    %382 = vector.broadcast %cst_165 : f32 to vector<16x1xf32>
    %383 = arith.divf %381, %382 : vector<16x1xf32>
    %384 = arith.mulf %375, %375 : vector<16x64xf32>
    %cst_166 = arith.constant dense<0.000000e+00> : vector<16xf32>
    %385 = vector.multi_reduction <add>, %384, %cst_166 [1] : vector<16x64xf32> to vector<16xf32>
    %386 = vector.shape_cast %385 : vector<16xf32> to vector<16x1xf32>
    %cst_167 = arith.constant 6.400000e+01 : f32
    %387 = vector.broadcast %cst_167 : f32 to vector<16x1xf32>
    %388 = arith.divf %386, %387 : vector<16x1xf32>
    %389 = arith.mulf %383, %383 : vector<16x1xf32>
    %390 = arith.subf %388, %389 : vector<16x1xf32>
    %391 = vector.broadcast %383 : vector<16x1xf32> to vector<16x64xf32>
    %392 = arith.subf %375, %391 : vector<16x64xf32>
    %cst_168 = arith.constant 9.99999974E-6 : f32
    %393 = vector.broadcast %cst_168 : f32 to vector<16x1xf32>
    %394 = arith.addf %390, %393 : vector<16x1xf32>
    %395 = math.rsqrt %394 : vector<16x1xf32>
    %396 = vector.broadcast %395 : vector<16x1xf32> to vector<16x64xf32>
    %397 = arith.mulf %392, %396 : vector<16x64xf32>
    %398 = vector.broadcast %377 : vector<1x64xf32> to vector<16x64xf32>
    %399 = arith.mulf %397, %398 : vector<16x64xf32>
    %400 = vector.broadcast %379 : vector<1x64xf32> to vector<16x64xf32>
    %401 = arith.addf %399, %400 : vector<16x64xf32>
    %c1_169 = arith.constant 1 : index
    %c0_170 = arith.constant 0 : index
    %c0_171 = arith.constant 0 : index
    %402 = vector.load %arg8[%c1_169, %c0_170, %c0_171] : memref<2x64x128xbf16, #tpu.memory_space<vmem>>, vector<1x64x128xbf16>
    %403 = vector.shape_cast %402 : vector<1x64x128xbf16> to vector<64x128xbf16>
    %404 = arith.truncf %401 : vector<16x64xf32> to vector<16x64xbf16>
    %cst_172 = arith.constant dense<0.000000e+00> : vector<16x128xf32>
    %405 = tpu.matmul %404, %403, %cst_172 {dimension_numbers = #tpu.dot_dimension_numbers<[1], [0], [0], [1], [0, 0, 1, 1], [], []>} : vector<16x64xbf16>, vector<64x128xbf16>, vector<16x128xf32> -> vector<16x128xf32>
    %c1_173 = arith.constant 1 : index
    %c0_174 = arith.constant 0 : index
    %c0_175 = arith.constant 0 : index
    %406 = vector.load %arg9[%c1_173, %c0_174, %c0_175] : memref<2x1x128xf32, #tpu.memory_space<vmem>>, vector<1x1x128xf32>
    %407 = vector.shape_cast %406 : vector<1x1x128xf32> to vector<1x128xf32>
    %408 = vector.broadcast %407 : vector<1x128xf32> to vector<16x128xf32>
    %409 = arith.addf %405, %408 : vector<16x128xf32>
    %cst_176 = arith.constant 0.000000e+00 : f32
    %410 = vector.broadcast %cst_176 : f32 to vector<16x128xf32>
    %411 = arith.maximumf %409, %410 : vector<16x128xf32>
    %c1_177 = arith.constant 1 : index
    %c0_178 = arith.constant 0 : index
    %c0_179 = arith.constant 0 : index
    %412 = vector.load %arg10[%c1_177, %c0_178, %c0_179] : memref<2x128x64xbf16, #tpu.memory_space<vmem>>, vector<1x128x64xbf16>
    %413 = vector.shape_cast %412 : vector<1x128x64xbf16> to vector<128x64xbf16>
    %414 = arith.truncf %411 : vector<16x128xf32> to vector<16x128xbf16>
    %cst_180 = arith.constant dense<0.000000e+00> : vector<16x64xf32>
    %415 = tpu.matmul %414, %413, %cst_180 {dimension_numbers = #tpu.dot_dimension_numbers<[1], [0], [0], [1], [0, 0, 1, 1], [], []>} : vector<16x128xbf16>, vector<128x64xbf16>, vector<16x64xf32> -> vector<16x64xf32>
    %c1_181 = arith.constant 1 : index
    %c0_182 = arith.constant 0 : index
    %c0_183 = arith.constant 0 : index
    %416 = vector.load %arg11[%c1_181, %c0_182, %c0_183] : memref<2x1x64xf32, #tpu.memory_space<vmem>>, vector<1x1x64xf32>
    %417 = vector.shape_cast %416 : vector<1x1x64xf32> to vector<1x64xf32>
    %418 = vector.broadcast %417 : vector<1x64xf32> to vector<16x64xf32>
    %419 = arith.addf %415, %418 : vector<16x64xf32>
    %420 = arith.addf %401, %419 : vector<16x64xf32>
    %c1_184 = arith.constant 1 : index
    %c0_185 = arith.constant 0 : index
    %c0_186 = arith.constant 0 : index
    %421 = vector.load %arg12[%c1_184, %c0_185, %c0_186] : memref<2x1x64xf32, #tpu.memory_space<vmem>>, vector<1x1x64xf32>
    %422 = vector.shape_cast %421 : vector<1x1x64xf32> to vector<1x64xf32>
    %c1_187 = arith.constant 1 : index
    %c0_188 = arith.constant 0 : index
    %c0_189 = arith.constant 0 : index
    %423 = vector.load %arg13[%c1_187, %c0_188, %c0_189] : memref<2x1x64xf32, #tpu.memory_space<vmem>>, vector<1x1x64xf32>
    %424 = vector.shape_cast %423 : vector<1x1x64xf32> to vector<1x64xf32>
    %cst_190 = arith.constant dense<0.000000e+00> : vector<16xf32>
    %425 = vector.multi_reduction <add>, %420, %cst_190 [1] : vector<16x64xf32> to vector<16xf32>
    %426 = vector.shape_cast %425 : vector<16xf32> to vector<16x1xf32>
    %cst_191 = arith.constant 6.400000e+01 : f32
    %427 = vector.broadcast %cst_191 : f32 to vector<16x1xf32>
    %428 = arith.divf %426, %427 : vector<16x1xf32>
    %429 = arith.mulf %420, %420 : vector<16x64xf32>
    %cst_192 = arith.constant dense<0.000000e+00> : vector<16xf32>
    %430 = vector.multi_reduction <add>, %429, %cst_192 [1] : vector<16x64xf32> to vector<16xf32>
    %431 = vector.shape_cast %430 : vector<16xf32> to vector<16x1xf32>
    %cst_193 = arith.constant 6.400000e+01 : f32
    %432 = vector.broadcast %cst_193 : f32 to vector<16x1xf32>
    %433 = arith.divf %431, %432 : vector<16x1xf32>
    %434 = arith.mulf %428, %428 : vector<16x1xf32>
    %435 = arith.subf %433, %434 : vector<16x1xf32>
    %436 = vector.broadcast %428 : vector<16x1xf32> to vector<16x64xf32>
    %437 = arith.subf %420, %436 : vector<16x64xf32>
    %cst_194 = arith.constant 9.99999974E-6 : f32
    %438 = vector.broadcast %cst_194 : f32 to vector<16x1xf32>
    %439 = arith.addf %435, %438 : vector<16x1xf32>
    %440 = math.rsqrt %439 : vector<16x1xf32>
    %441 = vector.broadcast %440 : vector<16x1xf32> to vector<16x64xf32>
    %442 = arith.mulf %437, %441 : vector<16x64xf32>
    %443 = vector.broadcast %422 : vector<1x64xf32> to vector<16x64xf32>
    %444 = arith.mulf %442, %443 : vector<16x64xf32>
    %445 = vector.broadcast %424 : vector<1x64xf32> to vector<16x64xf32>
    %446 = arith.addf %444, %445 : vector<16x64xf32>
    %c0_195 = arith.constant 0 : index
    %c0_196 = arith.constant 0 : index
    %447 = vector.load %arg14[%c0_195, %c0_196] : memref<64x1024xbf16, #tpu.memory_space<vmem>>, vector<64x1024xbf16>
    %448 = arith.truncf %446 : vector<16x64xf32> to vector<16x64xbf16>
    %cst_197 = arith.constant dense<0.000000e+00> : vector<16x1024xf32>
    %449 = tpu.matmul %448, %447, %cst_197 {dimension_numbers = #tpu.dot_dimension_numbers<[1], [0], [0], [1], [0, 0, 1, 1], [], []>} : vector<16x64xbf16>, vector<64x1024xbf16>, vector<16x1024xf32> -> vector<16x1024xf32>
    %c0_198 = arith.constant 0 : index
    %c0_199 = arith.constant 0 : index
    %450 = vector.load %arg15[%c0_198, %c0_199] : memref<1x1024xf32, #tpu.memory_space<vmem>>, vector<1x1024xf32>
    %451 = vector.broadcast %450 : vector<1x1024xf32> to vector<16x1024xf32>
    %452 = arith.addf %449, %451 : vector<16x1024xf32>
    %c0_200 = arith.constant 0 : index
    %c0_201 = arith.constant 0 : index
    %453 = vector.load %arg16[%c0_200, %c0_201] : memref<16x1024xf32, #tpu.memory_space<vmem>>, vector<16x1024xf32>
    tpu.vector_store %arg16[%c0_200, %c0_201], %452 {strides = array<i32>} : memref<16x1024xf32, #tpu.memory_space<vmem>>, vector<16x1024xf32>,
    return
  }
}

</mosaic_0001>

<llo_original>
// kernel: simple_transformer_forward.1
$region0: #{simple_transformer_forward.1}
  #allocation0 [shape = 'u32[]', space=smem, size = 0x4, offset = 0x4, fixed_abs, tag = 'smem constant byte address 0x4 - core index']
  #allocation1 [shape = 'u32[72,128]{1,0:T(1,128)}', space=vmem, size = 0x9000, scoped, tag = 'internal scratch']
  #allocation2 [shape = 'f32[16,64]{1,0:T(8,128)}', space=vmem, size = 0x2000, scoped, tag = 'scratch operand']
  %s0 = inlined_call_operand.vmem [shape: s32[16], index: 0, kind: input, shape index: {}]
  %s1 = inlined_call_operand.vmem [shape: f32[1000,64], index: 1, kind: input, shape index: {}]
  %s2 = inlined_call_operand.vmem [shape: bf16[2,64,192], index: 2, kind: input, shape index: {}]
  %s3 = inlined_call_operand.vmem [shape: f32[2,1,192], index: 3, kind: input, shape index: {}]
  %s4 = inlined_call_operand.vmem [shape: bf16[2,64,64], index: 4, kind: input, shape index: {}]
  %s5 = inlined_call_operand.vmem [shape: f32[2,1,64], index: 5, kind: input, shape index: {}]
  %s6 = inlined_call_operand.vmem [shape: f32[2,1,64], index: 6, kind: input, shape index: {}]
  %s7 = inlined_call_operand.vmem [shape: f32[2,1,64], index: 7, kind: input, shape index: {}]
  %s8 = inlined_call_operand.vmem [shape: bf16[2,64,128], index: 8, kind: input, shape index: {}]
  %s9 = inlined_call_operand.vmem [shape: f32[2,1,128], index: 9, kind: input, shape index: {}]
  %s10 = inlined_call_operand.vmem [shape: bf16[2,128,64], index: 10, kind: input, shape index: {}]
  %s11 = inlined_call_operand.vmem [shape: f32[2,1,64], index: 11, kind: input, shape index: {}]
  %s12 = inlined_call_operand.vmem [shape: f32[2,1,64], index: 12, kind: input, shape index: {}]
  %s13 = inlined_call_operand.vmem [shape: f32[2,1,64], index: 13, kind: input, shape index: {}]
  %s14 = inlined_call_operand.vmem [shape: bf16[64,1024], index: 14, kind: input, shape index: {}]
  %s15 = inlined_call_operand.vmem [shape: f32[1,1024], index: 15, kind: input, shape index: {}]
  %s16 = inlined_call_operand.vmem [shape: f32[16,1024], index: 16, kind: output, shape index: {}]
  %s17 = sld [smem:[#allocation0]]
  $region78: #{simple_transformer_forward.1} parent=0
    _
  %s19 = ssub.s32 1, %s17
  %s20 = scalar_select 0, %s19, %s17
  $region1: #{simple_transformer_forward.1} parent=0
    #allocation3 [shape = 'u8[512]{0}', space=smem, size = 0x200, scoped, tag = 'input window, operand 0, single buffered']
    #allocation4 [shape = 's32[1]{0}', space=sflag, size = 0x4, scoped, tag = 'scoped memory for simple_transformer_forward.1']
    %21 = vsyncpa [#allocation4], 0
    // Predicated region
    $region2: #{simple_transformer_forward.1} parent=1 // pred_check
      _
    $region3: #{simple_transformer_forward.1} parent=1 // pred_check_branch
      %23 = sbr.rel (0) target = $region5
    $region4: #{simple_transformer_forward.1} parent=1 // pred_region
      %25 = vsyncadd [#allocation4], 0
      %s27 = sshll.u32 %s0, 4
      %s28 = int_to_ptr.vmem [resolvable:$true] %s27
      %30 = dma.vmem_to_smem %s28, 16, [#allocation3], [#allocation4]
    $region5: #{simple_transformer_forward.1} parent=1 // pred_fallthru
      _
    // Predicated region
    $region6: #{simple_transformer_forward.1} parent=1 // pred_check
      _
    $region7: #{simple_transformer_forward.1} parent=1 // pred_check_branch
      %32 = sbr.rel (0) target = $region9
    $region8: #{simple_transformer_forward.1} parent=1 // pred_region
      _
    $region9: #{simple_transformer_forward.1} parent=1 // pred_fallthru
      _
    // Predicated region
    $region10: #{simple_transformer_forward.1} parent=1 // pred_check
      _
    $region11: #{simple_transformer_forward.1} parent=1 // pred_check_branch
      %34 = sbr.rel (0) target = $region13
    $region12: #{simple_transformer_forward.1} parent=1 // pred_region
      _
    $region13: #{simple_transformer_forward.1} parent=1 // pred_fallthru
      _
    // Predicated region
    $region14: #{simple_transformer_forward.1} parent=1 // pred_check
      _
    $region15: #{simple_transformer_forward.1} parent=1 // pred_check_branch
      %36 = sbr.rel (0) target = $region17
    $region16: #{simple_transformer_forward.1} parent=1 // pred_region
      _
    $region17: #{simple_transformer_forward.1} parent=1 // pred_fallthru
      _
    // Predicated region
    $region18: #{simple_transformer_forward.1} parent=1 // pred_check
      _
    $region19: #{simple_transformer_forward.1} parent=1 // pred_check_branch
      %38 = sbr.rel (0) target = $region21
    $region20: #{simple_transformer_forward.1} parent=1 // pred_region
      _
    $region21: #{simple_transformer_forward.1} parent=1 // pred_fallthru
      _
    // Predicated region
    $region22: #{simple_transformer_forward.1} parent=1 // pred_check
      _
    $region23: #{simple_transformer_forward.1} parent=1 // pred_check_branch
      %40 = sbr.rel (0) target = $region25
    $region24: #{simple_transformer_forward.1} parent=1 // pred_region
      _
    $region25: #{simple_transformer_forward.1} parent=1 // pred_fallthru
      _
    // Predicated region
    $region26: #{simple_transformer_forward.1} parent=1 // pred_check
      _
    $region27: #{simple_transformer_forward.1} parent=1 // pred_check_branch
      %42 = sbr.rel (0) target = $region29
    $region28: #{simple_transformer_forward.1} parent=1 // pred_region
      _
    $region29: #{simple_transformer_forward.1} parent=1 // pred_fallthru
      _
    // Predicated region
    $region30: #{simple_transformer_forward.1} parent=1 // pred_check
      _
    $region31: #{simple_transformer_forward.1} parent=1 // pred_check_branch
      %44 = sbr.rel (0) target = $region33
    $region32: #{simple_transformer_forward.1} parent=1 // pred_region
      _
    $region33: #{simple_transformer_forward.1} parent=1 // pred_fallthru
      _
    // Predicated region
    $region34: #{simple_transformer_forward.1} parent=1 // pred_check
      _
    $region35: #{simple_transformer_forward.1} parent=1 // pred_check_branch
      %46 = sbr.rel (0) target = $region37
    $region36: #{simple_transformer_forward.1} parent=1 // pred_region
      _
    $region37: #{simple_transformer_forward.1} parent=1 // pred_fallthru
      _
    // Predicated region
    $region38: #{simple_transformer_forward.1} parent=1 // pred_check
      _
    $region39: #{simple_transformer_forward.1} parent=1 // pred_check_branch
      %48 = sbr.rel (0) target = $region41
    $region40: #{simple_transformer_forward.1} parent=1 // pred_region
      _
    $region41: #{simple_transformer_forward.1} parent=1 // pred_fallthru
      _
    // Predicated region
    $region42: #{simple_transformer_forward.1} parent=1 // pred_check
      _
    $region43: #{simple_transformer_forward.1} parent=1 // pred_check_branch
      %50 = sbr.rel (0) target = $region45
    $region44: #{simple_transformer_forward.1} parent=1 // pred_region
      _
    $region45: #{simple_transformer_forward.1} parent=1 // pred_fallthru
      _
    // Predicated region
    $region46: #{simple_transformer_forward.1} parent=1 // pred_check
      _
    $region47: #{simple_transformer_forward.1} parent=1 // pred_check_branch
      %52 = sbr.rel (0) target = $region49
    $region48: #{simple_transformer_forward.1} parent=1 // pred_region
      _
    $region49: #{simple_transformer_forward.1} parent=1 // pred_fallthru
      _
    // Predicated region
    $region50: #{simple_transformer_forward.1} parent=1 // pred_check
      _
    $region51: #{simple_transformer_forward.1} parent=1 // pred_check_branch
      %54 = sbr.rel (0) target = $region53
    $region52: #{simple_transformer_forward.1} parent=1 // pred_region
      _
    $region53: #{simple_transformer_forward.1} parent=1 // pred_fallthru
      _
    // Predicated region
    $region54: #{simple_transformer_forward.1} parent=1 // pred_check
      _
    $region55: #{simple_transformer_forward.1} parent=1 // pred_check_branch
      %56 = sbr.rel (0) target = $region57
    $region56: #{simple_transformer_forward.1} parent=1 // pred_region
      _
    $region57: #{simple_transformer_forward.1} parent=1 // pred_fallthru
      _
    // Predicated region
    $region58: #{simple_transformer_forward.1} parent=1 // pred_check
      _
    $region59: #{simple_transformer_forward.1} parent=1 // pred_check_branch
      %58 = sbr.rel (0) target = $region61
    $region60: #{simple_transformer_forward.1} parent=1 // pred_region
      _
    $region61: #{simple_transformer_forward.1} parent=1 // pred_fallthru
      _
    // Predicated region
    $region62: #{simple_transformer_forward.1} parent=1 // pred_check
      _
    $region63: #{simple_transformer_forward.1} parent=1 // pred_check_branch
      %60 = sbr.rel (0) target = $region65
    $region64: #{simple_transformer_forward.1} parent=1 // pred_region
      _
    $region65: #{simple_transformer_forward.1} parent=1 // pred_fallthru
      _
    // Predicated region
    $region66: #{simple_transformer_forward.1} parent=1 // pred_check
      _
    $region67: #{simple_transformer_forward.1} parent=1 // pred_check_branch
      %62 = sbr.rel (0) target = $region69
    $region68: #{simple_transformer_forward.1} parent=1 // pred_region
      %64 = dma.done [#allocation4], 16
    $region69: #{simple_transformer_forward.1} parent=1 // pred_fallthru
      _
    %65 = sfence
    %s67 = sld [smem:[#allocation3]]
    %s68 = scalar_lea.vmem %s1, %s67
    %v69 = vld [vmem:[%s68] sm:$0x1]
    %vm70 = vcmask 516096
    %71 = vst.msk [vmem:[#allocation2] sm:$0x1] %vm70, %v69
    %s72 = sld [smem:[#allocation3 + $0x1]]
    %s73 = scalar_lea.vmem %s1, %s72
    %v74 = vld [vmem:[%s73] sm:$0x1]
    %75 = vst.msk [vmem:[#allocation2 + $0x1] sm:$0x1] %vm70, %v74
    %s76 = sld [smem:[#allocation3 + $0x2]]
    %s77 = scalar_lea.vmem %s1, %s76
    %v78 = vld [vmem:[%s77] sm:$0x1]
    %79 = vst.msk [vmem:[#allocation2 + $0x2] sm:$0x1] %vm70, %v78
    %s80 = sld [smem:[#allocation3 + $0x3]]
    %s81 = scalar_lea.vmem %s1, %s80
    %v82 = vld [vmem:[%s81] sm:$0x1]
    %83 = vst.msk [vmem:[#allocation2 + $0x3] sm:$0x1] %vm70, %v82
    %s84 = sld [smem:[#allocation3 + $0x4]]
    %s85 = scalar_lea.vmem %s1, %s84
    %v86 = vld [vmem:[%s85] sm:$0x1]
    %87 = vst.msk [vmem:[#allocation2 + $0x4] sm:$0x1] %vm70, %v86
    %s88 = sld [smem:[#allocation3 + $0x5]]
    %s89 = scalar_lea.vmem %s1, %s88
    %v90 = vld [vmem:[%s89] sm:$0x1]
    %91 = vst.msk [vmem:[#allocation2 + $0x5] sm:$0x1] %vm70, %v90
    %s92 = sld [smem:[#allocation3 + $0x6]]
    %s93 = scalar_lea.vmem %s1, %s92
    %v94 = vld [vmem:[%s93] sm:$0x1]
    %95 = vst.msk [vmem:[#allocation2 + $0x6] sm:$0x1] %vm70, %v94
    %s96 = sld [smem:[#allocation3 + $0x7]]
    %s97 = scalar_lea.vmem %s1, %s96
    %v98 = vld [vmem:[%s97] sm:$0x1]
    %99 = vst.msk [vmem:[#allocation2 + $0x7] sm:$0x1] %vm70, %v98
    %s100 = sld [smem:[#allocation3 + $0x8]]
    %s101 = scalar_lea.vmem %s1, %s100
    %v102 = vld [vmem:[%s101] sm:$0x1]
    %103 = vst.msk [vmem:[#allocation2 + $0x8] sm:$0x1] %vm70, %v102
    %s104 = sld [smem:[#allocation3 + $0x9]]
    %s105 = scalar_lea.vmem %s1, %s104
    %v106 = vld [vmem:[%s105] sm:$0x1]
    %107 = vst.msk [vmem:[#allocation2 + $0x9] sm:$0x1] %vm70, %v106
    %s108 = sld [smem:[#allocation3 + $0xa]]
    %s109 = scalar_lea.vmem %s1, %s108
    %v110 = vld [vmem:[%s109] sm:$0x1]
    %111 = vst.msk [vmem:[#allocation2 + $0xa] sm:$0x1] %vm70, %v110
    %s112 = sld [smem:[#allocation3 + $0xb]]
    %s113 = scalar_lea.vmem %s1, %s112
    %v114 = vld [vmem:[%s113] sm:$0x1]
    %115 = vst.msk [vmem:[#allocation2 + $0xb] sm:$0x1] %vm70, %v114
    %s116 = sld [smem:[#allocation3 + $0xc]]
    %s117 = scalar_lea.vmem %s1, %s116
    %v118 = vld [vmem:[%s117] sm:$0x1]
    %119 = vst.msk [vmem:[#allocation2 + $0xc] sm:$0x1] %vm70, %v118
    %s120 = sld [smem:[#allocation3 + $0xd]]
    %s121 = scalar_lea.vmem %s1, %s120
    %v122 = vld [vmem:[%s121] sm:$0x1]
    %123 = vst.msk [vmem:[#allocation2 + $0xd] sm:$0x1] %vm70, %v122
    %s124 = sld [smem:[#allocation3 + $0xe]]
    %s125 = scalar_lea.vmem %s1, %s124
    %v126 = vld [vmem:[%s125] sm:$0x1]
    %127 = vst.msk [vmem:[#allocation2 + $0xe] sm:$0x1] %vm70, %v126
    %s128 = sld [smem:[#allocation3 + $0xf]]
    %s129 = scalar_lea.vmem %s1, %s128
    %v130 = vld [vmem:[%s129] sm:$0x1]
    %131 = vst.msk [vmem:[#allocation2 + $0xf] sm:$0x1] %vm70, %v130
    %v132 = vld [vmem:[#allocation2] sm:$0xff]
    %v133 = vld [vmem:[#allocation2 + $0x8] sm:$0xff]
    %v134 = vlaneseq
    %v135 = vshrl.u32 %v134, 7
    %v136 = vadd.s32 %v135, 8
    %v137 = vcvt.s32.f32 %v135
    %v138 = vcvt.s32.f32 %v136
    %v139 = vlaneseq
    %v140 = vand.u32 %v139, 127
    %v141 = vcvt.s32.f32 %v140
    %v142 = vrcp.pop 2.0
    %v143 = vmul.f32 2.0, %v142
    %v144 = vsub.f32 1.0, %v143
    %v145 = vmul.f32 %v142, %v144
    %v146 = vadd.f32 %v142, %v145
    %vm147 = vweird.f32 %v142
    %v148 = vsel %vm147, %v142, %v146
    %v149 = vmul.f32 %v137, %v148
    %v150 = vmul.f32 %v138, %v148
    %v151 = vfloor.f32 %v149
    %v152 = vfloor.f32 %v150
    %v153 = vmul.f32 %v151, 2.0
    %v154 = vmul.f32 %v152, 2.0
    %v155 = vsub.f32 %v137, %v153
    %v156 = vsub.f32 %v138, %v154
    %v157 = vmul.f32 %v141, %v148
    %v158 = vfloor.f32 %v157
    %v159 = vmul.f32 %v158, 2.0
    %v160 = vsub.f32 %v141, %v159
    %vm161 = vcmp.eq.f32.partialorder %v155, %v160
    %vm162 = vcmp.eq.f32.partialorder %v156, %v160
    %v163 = vsel %vm161, 0.0, -1e+30
    %v164 = vsel %vm162, 0.0, -1e+30
    %v165 = vld [vmem:[%s2] sm:$0xff]
    %v166 = vld [vmem:[%s2 + $0x8] sm:$0xff]
    %v167 = vld [vmem:[%s2 + $0x10] sm:$0xff]
    %v168 = vld [vmem:[%s2 + $0x18] sm:$0xff]
    %v169 = vld [vmem:[%s2 + $0x20] sm:$0xff]
    %v170 = vld [vmem:[%s2 + $0x28] sm:$0xff]
    %v171 = vld [vmem:[%s2 + $0x30] sm:$0xff]
    %v172 = vld [vmem:[%s2 + $0x38] sm:$0xff]
    %v173 = vpack.c.bf16 %v133, %v132
    %v174 = vld [vmem:[%s3] sm:$0x3]
    %v176 = vperm.slane %v174, 0
    %v177 = vperm.slane %v174, 1
    %v188 = vunpack.c.l.b16 %v165
    %v189 = vunpack.c.h.b16 %v165
    %v190 = vunpack.c.l.b16 %v166
    %v191 = vunpack.c.h.b16 %v166
    %v192 = vunpack.c.l.b16 %v167
    %v193 = vunpack.c.h.b16 %v167
    %v194 = vunpack.c.l.b16 %v168
    %v195 = vunpack.c.h.b16 %v168
    %v196 = vunpack.c.l.b16 %v169
    %v197 = vunpack.c.h.b16 %v169
    %v198 = vunpack.c.l.b16 %v170
    %v199 = vunpack.c.h.b16 %v170
    %v200 = vunpack.c.l.b16 %v171
    %v201 = vunpack.c.h.b16 %v171
    %v202 = vunpack.c.l.b16 %v172
    %v203 = vunpack.c.h.b16 %v172
    %v204 = vpack.c.b16 %v190, %v188
    %v205 = vpack.c.b16 %v191, %v189
    %v206 = vpack.c.b16 %v194, %v192
    %v207 = vpack.c.b16 %v195, %v193
    %v208 = vpack.c.b16 %v198, %v196
    %v209 = vpack.c.b16 %v199, %v197
    %v210 = vpack.c.b16 %v202, %v200
    %v211 = vpack.c.b16 %v203, %v201
    %vm220 = vcmask 523264
    %v222 = vsel %vm220, %v173, 0
    %224 = vmatpush.bf16.msra.mxu0 0
    %225 = vmatpush.bf16.msra.mxu0 0
    %226 = vmatpush.bf16.msra.mxu0 0
    %227 = vmatpush.bf16.msra.mxu0 0
    %228 = vmatpush.bf16.msra.mxu0 %v210
    %229 = vmatpush.bf16.msra.mxu0 %v208
    %230 = vmatpush.bf16.msra.mxu0 %v206
    %231 = vmatpush.bf16.msra.mxu0 %v204
    %232 = vmatmul.bf16.gmra.mxu0 %v222
    %v233 = vpop.f32.mrf.mxu0
    %v234 = vadd.f32 %v176, %v233
    %v235 = vpop.f32.mrf.mxu0
    %v236 = vadd.f32 %v176, %v235
    %237 = vdwg.mxu0
    %238 = vmatpush.bf16.msra.mxu0 0
    %239 = vmatpush.bf16.msra.mxu0 0
    %240 = vmatpush.bf16.msra.mxu0 0
    %241 = vmatpush.bf16.msra.mxu0 0
    %242 = vmatpush.bf16.msra.mxu0 %v211
    %243 = vmatpush.bf16.msra.mxu0 %v209
    %244 = vmatpush.bf16.msra.mxu0 %v207
    %245 = vmatpush.bf16.msra.mxu0 %v205
    %246 = vmatmul.bf16.gmra.mxu0 %v222
    %v247 = vpop.f32.mrf.mxu0
    %v248 = vadd.f32 %v177, %v247
    %v249 = vpop.f32.mrf.mxu0
    %v250 = vadd.f32 %v177, %v249
    %251 = vdwg.mxu0
    %v252 = vld [vmem:[%s4] sm:$0xf]
    %v253 = vld [vmem:[%s4 + $0x4] sm:$0xf]
    %v254 = vld [vmem:[%s4 + $0x8] sm:$0xf]
    %v255 = vld [vmem:[%s4 + $0xc] sm:$0xf]
    %v256 = vld [vmem:[%s4 + $0x10] sm:$0xf]
    %v257 = vld [vmem:[%s4 + $0x14] sm:$0xf]
    %v258 = vld [vmem:[%s4 + $0x18] sm:$0xf]
    %v259 = vld [vmem:[%s4 + $0x1c] sm:$0xf]
    %v260 = vpack.c.bf16 %v236, %v234
    %v261 = vpack.c.bf16 %v250, %v248
    %263 = vrot.lane.b32.xlu0 %v260, 64
    %v264 = vpop.permute.xlu0 %263
    %vm265 = vcmask 130048
    %v267 = vsel %vm265, %v260, 0
    %v270 = vsel %vm265, %v264, 0
    %272 = vmatpush.bf16.xpose.msra.mxu0 0
    %273 = vmatpush.bf16.xpose.msra.mxu0 0
    %274 = vmatpush.bf16.xpose.msra.mxu0 0
    %275 = vmatpush.bf16.xpose.msra.mxu0 0
    %276 = vmatpush.bf16.xpose.msra.mxu0 0
    %277 = vmatpush.bf16.xpose.msra.mxu0 0
    %278 = vmatpush.bf16.xpose.msra.mxu0 0
    %279 = vmatpush.bf16.xpose.msra.mxu0 %v270
    %280 = vmatmul.bf16.gmra.mxu0 %v267
    %v281 = vpop.f32.mrf.mxu0
    %v282 = vadd.f32 %v163, %v281
    %v283 = vpop.f32.mrf.mxu0
    %v284 = vadd.f32 %v164, %v283
    %285 = vdwg.mxu0
    %v286 = vsel %vm265, %v282, -inf
    %287 = vmax.xlane.f32.xlu0 %v286
    %v288 = vpop.xlane.xlu0 %287
    %v289 = vsel %vm265, %v284, -inf
    %290 = vmax.xlane.f32.xlu0 %v289
    %v291 = vpop.xlane.xlu0 %290
    %v292 = vsub.f32 %v282, %v288
    %v293 = vsub.f32 %v284, %v291
    %v294 = vmul.f32 %v292, 1.442695
    %v295 = vpow.pop %v294
    %v296 = vmul.f32 %v293, 1.442695
    %v297 = vpow.pop %v296
    %v298 = vsel %vm265, %v295, 0.0
    %299 = vadd.xlane.f32.xlu0 %v298
    %v300 = vpop.xlane.xlu0 %299
    %v301 = vsel %vm265, %v297, 0.0
    %302 = vadd.xlane.f32.xlu0 %v301
    %v303 = vpop.xlane.xlu0 %302
    %v304 = vrcp.pop %v300
    %v305 = vrcp.pop %v303
    %v306 = vmul.f32 %v295, %v304
    %v307 = vmul.f32 %v297, %v305
    %v308 = vpack.c.bf16 %v307, %v306
    %v310 = vsel %vm265, %v308, 0
    %312 = vmatpush.bf16.msra.mxu0 0
    %313 = vmatpush.bf16.msra.mxu0 0
    %314 = vmatpush.bf16.msra.mxu0 0
    %315 = vmatpush.bf16.msra.mxu0 0
    %316 = vmatpush.bf16.msra.mxu0 0
    %317 = vmatpush.bf16.msra.mxu0 0
    %318 = vmatpush.bf16.msra.mxu0 0
    %319 = vmatpush.bf16.msra.mxu0 %v261
    %320 = vmatmul.bf16.gmra.mxu0 %v310
    %v321 = vpop.f32.mrf.mxu0
    %v322 = vadd.f32 0.0, %v321
    %v323 = vpop.f32.mrf.mxu0
    %v324 = vadd.f32 0.0, %v323
    %325 = vdwg.mxu0
    %v326 = vpack.c.bf16 %v324, %v322
    %327 = vrot.lane.b32.xlu0 %v260, 112
    %v328 = vpop.permute.xlu0 %327
    %329 = vrot.lane.b32.xlu0 %v260, 48
    %v330 = vpop.permute.xlu0 %329
    %v332 = vsel %vm265, %v328, 0
    %v335 = vsel %vm265, %v330, 0
    %337 = vmatpush.bf16.xpose.msra.mxu0 0
    %338 = vmatpush.bf16.xpose.msra.mxu0 0
    %339 = vmatpush.bf16.xpose.msra.mxu0 0
    %340 = vmatpush.bf16.xpose.msra.mxu0 0
    %341 = vmatpush.bf16.xpose.msra.mxu0 0
    %342 = vmatpush.bf16.xpose.msra.mxu0 0
    %343 = vmatpush.bf16.xpose.msra.mxu0 0
    %344 = vmatpush.bf16.xpose.msra.mxu0 %v335
    %345 = vmatmul.bf16.gmra.mxu0 %v332
    %v346 = vpop.f32.mrf.mxu0
    %v347 = vadd.f32 %v163, %v346
    %v348 = vpop.f32.mrf.mxu0
    %v349 = vadd.f32 %v164, %v348
    %350 = vdwg.mxu0
    %v351 = vsel %vm265, %v347, -inf
    %352 = vmax.xlane.f32.xlu0 %v351
    %v353 = vpop.xlane.xlu0 %352
    %v354 = vsel %vm265, %v349, -inf
    %355 = vmax.xlane.f32.xlu0 %v354
    %v356 = vpop.xlane.xlu0 %355
    %v357 = vsub.f32 %v347, %v353
    %v358 = vsub.f32 %v349, %v356
    %v359 = vmul.f32 %v357, 1.442695
    %v360 = vpow.pop %v359
    %v361 = vmul.f32 %v358, 1.442695
    %v362 = vpow.pop %v361
    %v363 = vsel %vm265, %v360, 0.0
    %364 = vadd.xlane.f32.xlu0 %v363
    %v365 = vpop.xlane.xlu0 %364
    %v366 = vsel %vm265, %v362, 0.0
    %367 = vadd.xlane.f32.xlu0 %v366
    %v368 = vpop.xlane.xlu0 %367
    %v369 = vrcp.pop %v365
    %v370 = vrcp.pop %v368
    %v371 = vmul.f32 %v360, %v369
    %v372 = vmul.f32 %v362, %v370
    %v373 = vpack.c.bf16 %v372, %v371
    %375 = vrot.lane.b32.xlu0 %v261, 112
    %v376 = vpop.permute.xlu0 %375
    %v379 = vsel %vm265, %v373, 0
    %381 = vmatpush.bf16.msra.mxu0 0
    %382 = vmatpush.bf16.msra.mxu0 0
    %383 = vmatpush.bf16.msra.mxu0 0
    %384 = vmatpush.bf16.msra.mxu0 0
    %385 = vmatpush.bf16.msra.mxu0 0
    %386 = vmatpush.bf16.msra.mxu0 0
    %387 = vmatpush.bf16.msra.mxu0 0
    %388 = vmatpush.bf16.msra.mxu0 %v376
    %389 = vmatmul.bf16.gmra.mxu0 %v379
    %v390 = vpop.f32.mrf.mxu0
    %v391 = vadd.f32 0.0, %v390
    %v392 = vpop.f32.mrf.mxu0
    %v393 = vadd.f32 0.0, %v392
    %394 = vdwg.mxu0
    %v395 = vpack.c.bf16 %v393, %v391
    %v398 = vunpack.c.l.b16 %v254
    %v399 = vunpack.c.l.b16 %v255
    %v400 = vpack.c.b16 %v399, %v398
    %v403 = vsel %vm265, %v395, 0
    %405 = vmatpush.bf16.msra.mxu0 0
    %406 = vmatpush.bf16.msra.mxu0 0
    %407 = vmatpush.bf16.msra.mxu0 0
    %408 = vmatpush.bf16.msra.mxu0 0
    %409 = vmatpush.bf16.msra.mxu0 0
    %410 = vmatpush.bf16.msra.mxu0 0
    %411 = vmatpush.bf16.msra.mxu0 0
    %412 = vmatpush.bf16.msra.mxu0 %v400
    %413 = vmatmul.bf16.gmra.mxu0 %v403
    %v414 = vpop.f32.mrf.mxu0
    %v415 = vadd.f32 0.0, %v414
    %v416 = vpop.f32.mrf.mxu0
    %v417 = vadd.f32 0.0, %v416
    %418 = vdwg.mxu0
    %v421 = vunpack.c.l.b16 %v252
    %v422 = vunpack.c.l.b16 %v253
    %v423 = vpack.c.b16 %v422, %v421
    %v426 = vsel %vm265, %v326, 0
    %428 = vmatpush.bf16.msra.mxu0 0
    %429 = vmatpush.bf16.msra.mxu0 0
    %430 = vmatpush.bf16.msra.mxu0 0
    %431 = vmatpush.bf16.msra.mxu0 0
    %432 = vmatpush.bf16.msra.mxu0 0
    %433 = vmatpush.bf16.msra.mxu0 0
    %434 = vmatpush.bf16.msra.mxu0 0
    %435 = vmatpush.bf16.msra.mxu0 %v423
    %436 = vmatmul.bf16.gmra.mxu0 %v426
    %v437 = vpop.f32.mrf.mxu0
    %v438 = vadd.f32 %v415, %v437
    %v439 = vpop.f32.mrf.mxu0
    %v440 = vadd.f32 %v417, %v439
    %441 = vdwg.mxu0
    %442 = vrot.lane.b32.xlu0 %v260, 96
    %v443 = vpop.permute.xlu0 %442
    %444 = vrot.lane.b32.xlu0 %v260, 32
    %v445 = vpop.permute.xlu0 %444
    %v447 = vsel %vm265, %v443, 0
    %v450 = vsel %vm265, %v445, 0
    %452 = vmatpush.bf16.xpose.msra.mxu0 0
    %453 = vmatpush.bf16.xpose.msra.mxu0 0
    %454 = vmatpush.bf16.xpose.msra.mxu0 0
    %455 = vmatpush.bf16.xpose.msra.mxu0 0
    %456 = vmatpush.bf16.xpose.msra.mxu0 0
    %457 = vmatpush.bf16.xpose.msra.mxu0 0
    %458 = vmatpush.bf16.xpose.msra.mxu0 0
    %459 = vmatpush.bf16.xpose.msra.mxu0 %v450
    %460 = vmatmul.bf16.gmra.mxu0 %v447
    %v461 = vpop.f32.mrf.mxu0
    %v462 = vadd.f32 %v163, %v461
    %v463 = vpop.f32.mrf.mxu0
    %v464 = vadd.f32 %v164, %v463
    %465 = vdwg.mxu0
    %v466 = vsel %vm265, %v462, -inf
    %467 = vmax.xlane.f32.xlu0 %v466
    %v468 = vpop.xlane.xlu0 %467
    %v469 = vsel %vm265, %v464, -inf
    %470 = vmax.xlane.f32.xlu0 %v469
    %v471 = vpop.xlane.xlu0 %470
    %v472 = vsub.f32 %v462, %v468
    %v473 = vsub.f32 %v464, %v471
    %v474 = vmul.f32 %v472, 1.442695
    %v475 = vpow.pop %v474
    %v476 = vmul.f32 %v473, 1.442695
    %v477 = vpow.pop %v476
    %v478 = vsel %vm265, %v475, 0.0
    %479 = vadd.xlane.f32.xlu0 %v478
    %v480 = vpop.xlane.xlu0 %479
    %v481 = vsel %vm265, %v477, 0.0
    %482 = vadd.xlane.f32.xlu0 %v481
    %v483 = vpop.xlane.xlu0 %482
    %v484 = vrcp.pop %v480
    %v485 = vrcp.pop %v483
    %v486 = vmul.f32 %v475, %v484
    %v487 = vmul.f32 %v477, %v485
    %v488 = vpack.c.bf16 %v487, %v486
    %489 = vrot.lane.b32.xlu0 %v261, 96
    %v490 = vpop.permute.xlu0 %489
    %v493 = vsel %vm265, %v488, 0
    %495 = vmatpush.bf16.msra.mxu0 0
    %496 = vmatpush.bf16.msra.mxu0 0
    %497 = vmatpush.bf16.msra.mxu0 0
    %498 = vmatpush.bf16.msra.mxu0 0
    %499 = vmatpush.bf16.msra.mxu0 0
    %500 = vmatpush.bf16.msra.mxu0 0
    %501 = vmatpush.bf16.msra.mxu0 0
    %502 = vmatpush.bf16.msra.mxu0 %v490
    %503 = vmatmul.bf16.gmra.mxu0 %v493
    %v504 = vpop.f32.mrf.mxu0
    %v505 = vadd.f32 0.0, %v504
    %v506 = vpop.f32.mrf.mxu0
    %v507 = vadd.f32 0.0, %v506
    %508 = vdwg.mxu0
    %v509 = vpack.c.bf16 %v507, %v505
    %v512 = vunpack.c.l.b16 %v256
    %v513 = vunpack.c.l.b16 %v257
    %v514 = vpack.c.b16 %v513, %v512
    %v517 = vsel %vm265, %v509, 0
    %519 = vmatpush.bf16.msra.mxu0 0
    %520 = vmatpush.bf16.msra.mxu0 0
    %521 = vmatpush.bf16.msra.mxu0 0
    %522 = vmatpush.bf16.msra.mxu0 0
    %523 = vmatpush.bf16.msra.mxu0 0
    %524 = vmatpush.bf16.msra.mxu0 0
    %525 = vmatpush.bf16.msra.mxu0 0
    %526 = vmatpush.bf16.msra.mxu0 %v514
    %527 = vmatmul.bf16.gmra.mxu0 %v517
    %v528 = vpop.f32.mrf.mxu0
    %v529 = vadd.f32 0.0, %v528
    %v530 = vpop.f32.mrf.mxu0
    %v531 = vadd.f32 0.0, %v530
    %532 = vdwg.mxu0
    %v533 = vadd.f32 %v438, %v529
    %v534 = vadd.f32 %v440, %v531
    %535 = vrot.lane.b32.xlu0 %v260, 80
    %v536 = vpop.permute.xlu0 %535
    %537 = vrot.lane.b32.xlu0 %v260, 16
    %v538 = vpop.permute.xlu0 %537
    %v540 = vsel %vm265, %v536, 0
    %v543 = vsel %vm265, %v538, 0
    %545 = vmatpush.bf16.xpose.msra.mxu0 0
    %546 = vmatpush.bf16.xpose.msra.mxu0 0
    %547 = vmatpush.bf16.xpose.msra.mxu0 0
    %548 = vmatpush.bf16.xpose.msra.mxu0 0
    %549 = vmatpush.bf16.xpose.msra.mxu0 0
    %550 = vmatpush.bf16.xpose.msra.mxu0 0
    %551 = vmatpush.bf16.xpose.msra.mxu0 0
    %552 = vmatpush.bf16.xpose.msra.mxu0 %v543
    %553 = vmatmul.bf16.gmra.mxu0 %v540
    %v554 = vpop.f32.mrf.mxu0
    %v555 = vadd.f32 %v163, %v554
    %v556 = vpop.f32.mrf.mxu0
    %v557 = vadd.f32 %v164, %v556
    %558 = vdwg.mxu0
    %v559 = vsel %vm265, %v555, -inf
    %560 = vmax.xlane.f32.xlu0 %v559
    %v561 = vpop.xlane.xlu0 %560
    %v562 = vsel %vm265, %v557, -inf
    %563 = vmax.xlane.f32.xlu0 %v562
    %v564 = vpop.xlane.xlu0 %563
    %v565 = vsub.f32 %v555, %v561
    %v566 = vsub.f32 %v557, %v564
    %v567 = vmul.f32 %v565, 1.442695
    %v568 = vpow.pop %v567
    %v569 = vmul.f32 %v566, 1.442695
    %v570 = vpow.pop %v569
    %v571 = vsel %vm265, %v568, 0.0
    %572 = vadd.xlane.f32.xlu0 %v571
    %v573 = vpop.xlane.xlu0 %572
    %v574 = vsel %vm265, %v570, 0.0
    %575 = vadd.xlane.f32.xlu0 %v574
    %v576 = vpop.xlane.xlu0 %575
    %v577 = vrcp.pop %v573
    %v578 = vrcp.pop %v576
    %v579 = vmul.f32 %v568, %v577
    %v580 = vmul.f32 %v570, %v578
    %v581 = vpack.c.bf16 %v580, %v579
    %582 = vrot.lane.b32.xlu0 %v261, 80
    %v583 = vpop.permute.xlu0 %582
    %v586 = vsel %vm265, %v581, 0
    %588 = vmatpush.bf16.msra.mxu0 0
    %589 = vmatpush.bf16.msra.mxu0 0
    %590 = vmatpush.bf16.msra.mxu0 0
    %591 = vmatpush.bf16.msra.mxu0 0
    %592 = vmatpush.bf16.msra.mxu0 0
    %593 = vmatpush.bf16.msra.mxu0 0
    %594 = vmatpush.bf16.msra.mxu0 0
    %595 = vmatpush.bf16.msra.mxu0 %v583
    %596 = vmatmul.bf16.gmra.mxu0 %v586
    %v597 = vpop.f32.mrf.mxu0
    %v598 = vadd.f32 0.0, %v597
    %v599 = vpop.f32.mrf.mxu0
    %v600 = vadd.f32 0.0, %v599
    %601 = vdwg.mxu0
    %v602 = vpack.c.bf16 %v600, %v598
    %v605 = vunpack.c.l.b16 %v258
    %v606 = vunpack.c.l.b16 %v259
    %v607 = vpack.c.b16 %v606, %v605
    %v610 = vsel %vm265, %v602, 0
    %612 = vmatpush.bf16.msra.mxu0 0
    %613 = vmatpush.bf16.msra.mxu0 0
    %614 = vmatpush.bf16.msra.mxu0 0
    %615 = vmatpush.bf16.msra.mxu0 0
    %616 = vmatpush.bf16.msra.mxu0 0
    %617 = vmatpush.bf16.msra.mxu0 0
    %618 = vmatpush.bf16.msra.mxu0 0
    %619 = vmatpush.bf16.msra.mxu0 %v607
    %620 = vmatmul.bf16.gmra.mxu0 %v610
    %v621 = vpop.f32.mrf.mxu0
    %v622 = vadd.f32 0.0, %v621
    %v623 = vpop.f32.mrf.mxu0
    %v624 = vadd.f32 0.0, %v623
    %625 = vdwg.mxu0
    %v626 = vadd.f32 %v533, %v622
    %v627 = vadd.f32 %v534, %v624
    %v628 = vld [vmem:[%s5] sm:$0x1]
    %v630 = vperm.slane %v628, 0
    %v632 = vadd.f32 %v626, %v630
    %v633 = vadd.f32 %v627, %v630
    %v634 = vadd.f32 %v132, %v632
    %v635 = vadd.f32 %v133, %v633
    %v636 = vld [vmem:[%s6] sm:$0x1]
    %v637 = vld [vmem:[%s7] sm:$0x1]
    %v638 = vsel %vm220, %v634, 0.0
    %639 = vadd.xlane.f32.xlu0 %v638
    %v640 = vpop.xlane.xlu0 %639
    %v641 = vsel %vm220, %v635, 0.0
    %642 = vadd.xlane.f32.xlu0 %v641
    %v643 = vpop.xlane.xlu0 %642
    %v644 = vrcp.pop 64.0
    %v645 = vmul.f32 64.0, %v644
    %v646 = vsub.f32 1.0, %v645
    %v647 = vmul.f32 %v644, %v646
    %v648 = vadd.f32 %v644, %v647
    %vm649 = vweird.f32 %v644
    %v650 = vsel %vm649, %v644, %v648
    %v651 = vmul.f32 %v640, %v650
    %v652 = vmul.f32 %v643, %v650
    %v653 = vmul.f32 %v634, %v634
    %v654 = vmul.f32 %v635, %v635
    %v655 = vsel %vm220, %v653, 0.0
    %656 = vadd.xlane.f32.xlu0 %v655
    %v657 = vpop.xlane.xlu0 %656
    %v658 = vsel %vm220, %v654, 0.0
    %659 = vadd.xlane.f32.xlu0 %v658
    %v660 = vpop.xlane.xlu0 %659
    %v661 = vmul.f32 %v657, %v650
    %v662 = vmul.f32 %v660, %v650
    %v663 = vmul.f32 %v651, %v651
    %v664 = vmul.f32 %v652, %v652
    %v665 = vsub.f32 %v661, %v663
    %v666 = vsub.f32 %v662, %v664
    %v667 = vsub.f32 %v634, %v651
    %v668 = vsub.f32 %v635, %v652
    %v669 = vadd.f32 %v665, 1e-05
    %v670 = vadd.f32 %v666, 1e-05
    %v671 = vrsqrt.pop %v669
    %v672 = vmul.f32 %v671, %v669
    %v673 = vmul.f32 %v672, %v671
    %v674 = vmul.f32 0.5, %v673
    %v675 = vsub.f32 1.5, %v674
    %v676 = vmul.f32 %v671, %v675
    %vm677 = vweird.f32 %v669
    %vm678 = vweird.f32 %v671
    %vm679 = vmor %vm677, %vm678
    %v680 = vsel %vm679, %v671, %v676
    %v681 = vrsqrt.pop %v670
    %v682 = vmul.f32 %v681, %v670
    %v683 = vmul.f32 %v682, %v681
    %v684 = vmul.f32 0.5, %v683
    %v685 = vsub.f32 1.5, %v684
    %v686 = vmul.f32 %v681, %v685
    %vm687 = vweird.f32 %v670
    %vm688 = vweird.f32 %v681
    %vm689 = vmor %vm687, %vm688
    %v690 = vsel %vm689, %v681, %v686
    %v691 = vmul.f32 %v667, %v680
    %v692 = vmul.f32 %v668, %v690
    %v694 = vperm.slane %v636, 0
    %v696 = vmul.f32 %v691, %v694
    %v697 = vmul.f32 %v692, %v694
    %v699 = vperm.slane %v637, 0
    %v701 = vadd.f32 %v696, %v699
    %v702 = vadd.f32 %v697, %v699
    %v703 = vld [vmem:[%s8] sm:$0xf]
    %v704 = vld [vmem:[%s8 + $0x4] sm:$0xf]
    %v705 = vld [vmem:[%s8 + $0x8] sm:$0xf]
    %v706 = vld [vmem:[%s8 + $0xc] sm:$0xf]
    %v707 = vld [vmem:[%s8 + $0x10] sm:$0xf]
    %v708 = vld [vmem:[%s8 + $0x14] sm:$0xf]
    %v709 = vld [vmem:[%s8 + $0x18] sm:$0xf]
    %v710 = vld [vmem:[%s8 + $0x1c] sm:$0xf]
    %v711 = vpack.c.bf16 %v702, %v701
    %v712 = vld [vmem:[%s9] sm:$0x1]
    %v714 = vperm.slane %v712, 0
    %v724 = vunpack.c.l.b16 %v703
    %v725 = vunpack.c.l.b16 %v704
    %v726 = vunpack.c.l.b16 %v705
    %v727 = vunpack.c.l.b16 %v706
    %v728 = vunpack.c.l.b16 %v707
    %v729 = vunpack.c.l.b16 %v708
    %v730 = vunpack.c.l.b16 %v709
    %v731 = vunpack.c.l.b16 %v710
    %v732 = vpack.c.b16 %v725, %v724
    %v733 = vpack.c.b16 %v727, %v726
    %v734 = vpack.c.b16 %v729, %v728
    %v735 = vpack.c.b16 %v731, %v730
    %v741 = vsel %vm220, %v711, 0
    %743 = vmatpush.bf16.msra.mxu0 0
    %744 = vmatpush.bf16.msra.mxu0 0
    %745 = vmatpush.bf16.msra.mxu0 0
    %746 = vmatpush.bf16.msra.mxu0 0
    %747 = vmatpush.bf16.msra.mxu0 %v735
    %748 = vmatpush.bf16.msra.mxu0 %v734
    %749 = vmatpush.bf16.msra.mxu0 %v733
    %750 = vmatpush.bf16.msra.mxu0 %v732
    %751 = vmatmul.bf16.gmra.mxu0 %v741
    %v752 = vpop.f32.mrf.mxu0
    %v753 = vadd.f32 %v714, %v752
    %v754 = vpop.f32.mrf.mxu0
    %v755 = vadd.f32 %v714, %v754
    %756 = vdwg.mxu0
    %v757 = vmax.f32 %v753, 0.0
    %v758 = vmax.f32 %v755, 0.0
    %v759 = vld [vmem:[%s10] sm:$0xf]
    %v760 = vld [vmem:[%s10 + $0x4] sm:$0xf]
    %v761 = vld [vmem:[%s10 + $0x8] sm:$0xf]
    %v762 = vld [vmem:[%s10 + $0xc] sm:$0xf]
    %v763 = vld [vmem:[%s10 + $0x10] sm:$0xf]
    %v764 = vld [vmem:[%s10 + $0x14] sm:$0xf]
    %v765 = vld [vmem:[%s10 + $0x18] sm:$0xf]
    %v766 = vld [vmem:[%s10 + $0x1c] sm:$0xf]
    %v767 = vld [vmem:[%s10 + $0x20] sm:$0xf]
    %v768 = vld [vmem:[%s10 + $0x24] sm:$0xf]
    %v769 = vld [vmem:[%s10 + $0x28] sm:$0xf]
    %v770 = vld [vmem:[%s10 + $0x2c] sm:$0xf]
    %v771 = vld [vmem:[%s10 + $0x30] sm:$0xf]
    %v772 = vld [vmem:[%s10 + $0x34] sm:$0xf]
    %v773 = vld [vmem:[%s10 + $0x38] sm:$0xf]
    %v774 = vld [vmem:[%s10 + $0x3c] sm:$0xf]
    %v775 = vpack.c.bf16 %v758, %v757
    %v776 = vld [vmem:[%s11] sm:$0x1]
    %v778 = vperm.slane %v776, 0
    %v796 = vunpack.c.l.b16 %v759
    %v797 = vunpack.c.l.b16 %v760
    %v798 = vunpack.c.l.b16 %v761
    %v799 = vunpack.c.l.b16 %v762
    %v800 = vunpack.c.l.b16 %v763
    %v801 = vunpack.c.l.b16 %v764
    %v802 = vunpack.c.l.b16 %v765
    %v803 = vunpack.c.l.b16 %v766
    %v804 = vunpack.c.l.b16 %v767
    %v805 = vunpack.c.l.b16 %v768
    %v806 = vunpack.c.l.b16 %v769
    %v807 = vunpack.c.l.b16 %v770
    %v808 = vunpack.c.l.b16 %v771
    %v809 = vunpack.c.l.b16 %v772
    %v810 = vunpack.c.l.b16 %v773
    %v811 = vunpack.c.l.b16 %v774
    %v812 = vpack.c.b16 %v797, %v796
    %v813 = vpack.c.b16 %v799, %v798
    %v814 = vpack.c.b16 %v801, %v800
    %v815 = vpack.c.b16 %v803, %v802
    %v816 = vpack.c.b16 %v805, %v804
    %v817 = vpack.c.b16 %v807, %v806
    %v818 = vpack.c.b16 %v809, %v808
    %v819 = vpack.c.b16 %v811, %v810
    %828 = vmatpush.bf16.msra.mxu0 %v819
    %829 = vmatpush.bf16.msra.mxu0 %v818
    %830 = vmatpush.bf16.msra.mxu0 %v817
    %831 = vmatpush.bf16.msra.mxu0 %v816
    %832 = vmatpush.bf16.msra.mxu0 %v815
    %833 = vmatpush.bf16.msra.mxu0 %v814
    %834 = vmatpush.bf16.msra.mxu0 %v813
    %835 = vmatpush.bf16.msra.mxu0 %v812
    %836 = vmatmul.bf16.gmra.mxu0 %v775
    %v837 = vpop.f32.mrf.mxu0
    %v838 = vadd.f32 %v778, %v837
    %v839 = vpop.f32.mrf.mxu0
    %v840 = vadd.f32 %v778, %v839
    %841 = vdwg.mxu0
    %v842 = vadd.f32 %v701, %v838
    %v843 = vadd.f32 %v702, %v840
    %v844 = vld [vmem:[%s12] sm:$0x1]
    %v845 = vld [vmem:[%s13] sm:$0x1]
    %v846 = vsel %vm220, %v842, 0.0
    %847 = vadd.xlane.f32.xlu0 %v846
    %v848 = vpop.xlane.xlu0 %847
    %v849 = vsel %vm220, %v843, 0.0
    %850 = vadd.xlane.f32.xlu0 %v849
    %v851 = vpop.xlane.xlu0 %850
    %v852 = vmul.f32 %v848, %v650
    %v853 = vmul.f32 %v851, %v650
    %v854 = vmul.f32 %v842, %v842
    %v855 = vmul.f32 %v843, %v843
    %v856 = vsel %vm220, %v854, 0.0
    %857 = vadd.xlane.f32.xlu0 %v856
    %v858 = vpop.xlane.xlu0 %857
    %v859 = vsel %vm220, %v855, 0.0
    %860 = vadd.xlane.f32.xlu0 %v859
    %v861 = vpop.xlane.xlu0 %860
    %v862 = vmul.f32 %v858, %v650
    %v863 = vmul.f32 %v861, %v650
    %v864 = vmul.f32 %v852, %v852
    %v865 = vmul.f32 %v853, %v853
    %v866 = vsub.f32 %v862, %v864
    %v867 = vsub.f32 %v863, %v865
    %v868 = vsub.f32 %v842, %v852
    %v869 = vsub.f32 %v843, %v853
    %v870 = vadd.f32 %v866, 1e-05
    %v871 = vadd.f32 %v867, 1e-05
    %v872 = vrsqrt.pop %v870
    %v873 = vmul.f32 %v872, %v870
    %v874 = vmul.f32 %v873, %v872
    %v875 = vmul.f32 0.5, %v874
    %v876 = vsub.f32 1.5, %v875
    %v877 = vmul.f32 %v872, %v876
    %vm878 = vweird.f32 %v870
    %vm879 = vweird.f32 %v872
    %vm880 = vmor %vm878, %vm879
    %v881 = vsel %vm880, %v872, %v877
    %v882 = vrsqrt.pop %v871
    %v883 = vmul.f32 %v882, %v871
    %v884 = vmul.f32 %v883, %v882
    %v885 = vmul.f32 0.5, %v884
    %v886 = vsub.f32 1.5, %v885
    %v887 = vmul.f32 %v882, %v886
    %vm888 = vweird.f32 %v871
    %vm889 = vweird.f32 %v882
    %vm890 = vmor %vm888, %vm889
    %v891 = vsel %vm890, %v882, %v887
    %v892 = vmul.f32 %v868, %v881
    %v893 = vmul.f32 %v869, %v891
    %v895 = vperm.slane %v844, 0
    %v897 = vmul.f32 %v892, %v895
    %v898 = vmul.f32 %v893, %v895
    %v900 = vperm.slane %v845, 0
    %v902 = vadd.f32 %v897, %v900
    %v903 = vadd.f32 %v898, %v900
    %s904 = scalar_lea.vmem %s2, 64
    %v905 = vld [vmem:[%s904] sm:$0xff]
    %v906 = vld [vmem:[%s904 + $0x8] sm:$0xff]
    %v907 = vld [vmem:[%s904 + $0x10] sm:$0xff]
    %v908 = vld [vmem:[%s904 + $0x18] sm:$0xff]
    %v909 = vld [vmem:[%s904 + $0x20] sm:$0xff]
    %v910 = vld [vmem:[%s904 + $0x28] sm:$0xff]
    %v911 = vld [vmem:[%s904 + $0x30] sm:$0xff]
    %v912 = vld [vmem:[%s904 + $0x38] sm:$0xff]
    %v913 = vpack.c.bf16 %v903, %v902
    %s914 = scalar_lea.vmem %s3, 2
    %v915 = vld [vmem:[%s914] sm:$0x3]
    %v917 = vperm.slane %v915, 0
    %v918 = vperm.slane %v915, 1
    %v929 = vunpack.c.l.b16 %v905
    %v930 = vunpack.c.h.b16 %v905
    %v931 = vunpack.c.l.b16 %v906
    %v932 = vunpack.c.h.b16 %v906
    %v933 = vunpack.c.l.b16 %v907
    %v934 = vunpack.c.h.b16 %v907
    %v935 = vunpack.c.l.b16 %v908
    %v936 = vunpack.c.h.b16 %v908
    %v937 = vunpack.c.l.b16 %v909
    %v938 = vunpack.c.h.b16 %v909
    %v939 = vunpack.c.l.b16 %v910
    %v940 = vunpack.c.h.b16 %v910
    %v941 = vunpack.c.l.b16 %v911
    %v942 = vunpack.c.h.b16 %v911
    %v943 = vunpack.c.l.b16 %v912
    %v944 = vunpack.c.h.b16 %v912
    %v945 = vpack.c.b16 %v931, %v929
    %v946 = vpack.c.b16 %v932, %v930
    %v947 = vpack.c.b16 %v935, %v933
    %v948 = vpack.c.b16 %v936, %v934
    %v949 = vpack.c.b16 %v939, %v937
    %v950 = vpack.c.b16 %v940, %v938
    %v951 = vpack.c.b16 %v943, %v941
    %v952 = vpack.c.b16 %v944, %v942
    %v962 = vsel %vm220, %v913, 0
    %964 = vmatpush.bf16.msra.mxu0 0
    %965 = vmatpush.bf16.msra.mxu0 0
    %966 = vmatpush.bf16.msra.mxu0 0
    %967 = vmatpush.bf16.msra.mxu0 0
    %968 = vmatpush.bf16.msra.mxu0 %v951
    %969 = vmatpush.bf16.msra.mxu0 %v949
    %970 = vmatpush.bf16.msra.mxu0 %v947
    %971 = vmatpush.bf16.msra.mxu0 %v945
    %972 = vmatmul.bf16.gmra.mxu0 %v962
    %v973 = vpop.f32.mrf.mxu0
    %v974 = vadd.f32 %v917, %v973
    %v975 = vpop.f32.mrf.mxu0
    %v976 = vadd.f32 %v917, %v975
    %977 = vdwg.mxu0
    %978 = vmatpush.bf16.msra.mxu0 0
    %979 = vmatpush.bf16.msra.mxu0 0
    %980 = vmatpush.bf16.msra.mxu0 0
    %981 = vmatpush.bf16.msra.mxu0 0
    %982 = vmatpush.bf16.msra.mxu0 %v952
    %983 = vmatpush.bf16.msra.mxu0 %v950
    %984 = vmatpush.bf16.msra.mxu0 %v948
    %985 = vmatpush.bf16.msra.mxu0 %v946
    %986 = vmatmul.bf16.gmra.mxu0 %v962
    %v987 = vpop.f32.mrf.mxu0
    %v988 = vadd.f32 %v918, %v987
    %v989 = vpop.f32.mrf.mxu0
    %v990 = vadd.f32 %v918, %v989
    %991 = vdwg.mxu0
    %s992 = scalar_lea.vmem %s4, 32
    %v993 = vld [vmem:[%s992] sm:$0xf]
    %v994 = vld [vmem:[%s992 + $0x4] sm:$0xf]
    %v995 = vld [vmem:[%s992 + $0x8] sm:$0xf]
    %v996 = vld [vmem:[%s992 + $0xc] sm:$0xf]
    %v997 = vld [vmem:[%s992 + $0x10] sm:$0xf]
    %v998 = vld [vmem:[%s992 + $0x14] sm:$0xf]
    %v999 = vld [vmem:[%s992 + $0x18] sm:$0xf]
    %v1000 = vld [vmem:[%s992 + $0x1c] sm:$0xf]
    %v1001 = vpack.c.bf16 %v976, %v974
    %v1002 = vpack.c.bf16 %v990, %v988
    %1004 = vrot.lane.b32.xlu0 %v1001, 64
    %v1005 = vpop.permute.xlu0 %1004
    %v1007 = vsel %vm265, %v1001, 0
    %v1010 = vsel %vm265, %v1005, 0
    %1012 = vmatpush.bf16.xpose.msra.mxu0 0
    %1013 = vmatpush.bf16.xpose.msra.mxu0 0
    %1014 = vmatpush.bf16.xpose.msra.mxu0 0
    %1015 = vmatpush.bf16.xpose.msra.mxu0 0
    %1016 = vmatpush.bf16.xpose.msra.mxu0 0
    %1017 = vmatpush.bf16.xpose.msra.mxu0 0
    %1018 = vmatpush.bf16.xpose.msra.mxu0 0
    %1019 = vmatpush.bf16.xpose.msra.mxu0 %v1010
    %1020 = vmatmul.bf16.gmra.mxu0 %v1007
    %v1021 = vpop.f32.mrf.mxu0
    %v1022 = vadd.f32 %v163, %v1021
    %v1023 = vpop.f32.mrf.mxu0
    %v1024 = vadd.f32 %v164, %v1023
    %1025 = vdwg.mxu0
    %v1026 = vsel %vm265, %v1022, -inf
    %1027 = vmax.xlane.f32.xlu0 %v1026
    %v1028 = vpop.xlane.xlu0 %1027
    %v1029 = vsel %vm265, %v1024, -inf
    %1030 = vmax.xlane.f32.xlu0 %v1029
    %v1031 = vpop.xlane.xlu0 %1030
    %v1032 = vsub.f32 %v1022, %v1028
    %v1033 = vsub.f32 %v1024, %v1031
    %v1034 = vmul.f32 %v1032, 1.442695
    %v1035 = vpow.pop %v1034
    %v1036 = vmul.f32 %v1033, 1.442695
    %v1037 = vpow.pop %v1036
    %v1038 = vsel %vm265, %v1035, 0.0
    %1039 = vadd.xlane.f32.xlu0 %v1038
    %v1040 = vpop.xlane.xlu0 %1039
    %v1041 = vsel %vm265, %v1037, 0.0
    %1042 = vadd.xlane.f32.xlu0 %v1041
    %v1043 = vpop.xlane.xlu0 %1042
    %v1044 = vrcp.pop %v1040
    %v1045 = vrcp.pop %v1043
    %v1046 = vmul.f32 %v1035, %v1044
    %v1047 = vmul.f32 %v1037, %v1045
    %v1048 = vpack.c.bf16 %v1047, %v1046
    %v1050 = vsel %vm265, %v1048, 0
    %1052 = vmatpush.bf16.msra.mxu0 0
    %1053 = vmatpush.bf16.msra.mxu0 0
    %1054 = vmatpush.bf16.msra.mxu0 0
    %1055 = vmatpush.bf16.msra.mxu0 0
    %1056 = vmatpush.bf16.msra.mxu0 0
    %1057 = vmatpush.bf16.msra.mxu0 0
    %1058 = vmatpush.bf16.msra.mxu0 0
    %1059 = vmatpush.bf16.msra.mxu0 %v1002
    %1060 = vmatmul.bf16.gmra.mxu0 %v1050
    %v1061 = vpop.f32.mrf.mxu0
    %v1062 = vadd.f32 0.0, %v1061
    %v1063 = vpop.f32.mrf.mxu0
    %v1064 = vadd.f32 0.0, %v1063
    %1065 = vdwg.mxu0
    %v1066 = vpack.c.bf16 %v1064, %v1062
    %1067 = vrot.lane.b32.xlu0 %v1001, 112
    %v1068 = vpop.permute.xlu0 %1067
    %1069 = vrot.lane.b32.xlu0 %v1001, 48
    %v1070 = vpop.permute.xlu0 %1069
    %v1072 = vsel %vm265, %v1068, 0
    %v1075 = vsel %vm265, %v1070, 0
    %1077 = vmatpush.bf16.xpose.msra.mxu0 0
    %1078 = vmatpush.bf16.xpose.msra.mxu0 0
    %1079 = vmatpush.bf16.xpose.msra.mxu0 0
    %1080 = vmatpush.bf16.xpose.msra.mxu0 0
    %1081 = vmatpush.bf16.xpose.msra.mxu0 0
    %1082 = vmatpush.bf16.xpose.msra.mxu0 0
    %1083 = vmatpush.bf16.xpose.msra.mxu0 0
    %1084 = vmatpush.bf16.xpose.msra.mxu0 %v1075
    %1085 = vmatmul.bf16.gmra.mxu0 %v1072
    %v1086 = vpop.f32.mrf.mxu0
    %v1087 = vadd.f32 %v163, %v1086
    %v1088 = vpop.f32.mrf.mxu0
    %v1089 = vadd.f32 %v164, %v1088
    %1090 = vdwg.mxu0
    %v1091 = vsel %vm265, %v1087, -inf
    %1092 = vmax.xlane.f32.xlu0 %v1091
    %v1093 = vpop.xlane.xlu0 %1092
    %v1094 = vsel %vm265, %v1089, -inf
    %1095 = vmax.xlane.f32.xlu0 %v1094
    %v1096 = vpop.xlane.xlu0 %1095
    %v1097 = vsub.f32 %v1087, %v1093
    %v1098 = vsub.f32 %v1089, %v1096
    %v1099 = vmul.f32 %v1097, 1.442695
    %v1100 = vpow.pop %v1099
    %v1101 = vmul.f32 %v1098, 1.442695
    %v1102 = vpow.pop %v1101
    %v1103 = vsel %vm265, %v1100, 0.0
    %1104 = vadd.xlane.f32.xlu0 %v1103
    %v1105 = vpop.xlane.xlu0 %1104
    %v1106 = vsel %vm265, %v1102, 0.0
    %1107 = vadd.xlane.f32.xlu0 %v1106
    %v1108 = vpop.xlane.xlu0 %1107
    %v1109 = vrcp.pop %v1105
    %v1110 = vrcp.pop %v1108
    %v1111 = vmul.f32 %v1100, %v1109
    %v1112 = vmul.f32 %v1102, %v1110
    %v1113 = vpack.c.bf16 %v1112, %v1111
    %1115 = vrot.lane.b32.xlu0 %v1002, 112
    %v1116 = vpop.permute.xlu0 %1115
    %v1119 = vsel %vm265, %v1113, 0
    %1121 = vmatpush.bf16.msra.mxu0 0
    %1122 = vmatpush.bf16.msra.mxu0 0
    %1123 = vmatpush.bf16.msra.mxu0 0
    %1124 = vmatpush.bf16.msra.mxu0 0
    %1125 = vmatpush.bf16.msra.mxu0 0
    %1126 = vmatpush.bf16.msra.mxu0 0
    %1127 = vmatpush.bf16.msra.mxu0 0
    %1128 = vmatpush.bf16.msra.mxu0 %v1116
    %1129 = vmatmul.bf16.gmra.mxu0 %v1119
    %v1130 = vpop.f32.mrf.mxu0
    %v1131 = vadd.f32 0.0, %v1130
    %v1132 = vpop.f32.mrf.mxu0
    %v1133 = vadd.f32 0.0, %v1132
    %1134 = vdwg.mxu0
    %v1135 = vpack.c.bf16 %v1133, %v1131
    %v1138 = vunpack.c.l.b16 %v995
    %v1139 = vunpack.c.l.b16 %v996
    %v1140 = vpack.c.b16 %v1139, %v1138
    %v1143 = vsel %vm265, %v1135, 0
    %1145 = vmatpush.bf16.msra.mxu0 0
    %1146 = vmatpush.bf16.msra.mxu0 0
    %1147 = vmatpush.bf16.msra.mxu0 0
    %1148 = vmatpush.bf16.msra.mxu0 0
    %1149 = vmatpush.bf16.msra.mxu0 0
    %1150 = vmatpush.bf16.msra.mxu0 0
    %1151 = vmatpush.bf16.msra.mxu0 0
    %1152 = vmatpush.bf16.msra.mxu0 %v1140
    %1153 = vmatmul.bf16.gmra.mxu0 %v1143
    %v1154 = vpop.f32.mrf.mxu0
    %v1155 = vadd.f32 0.0, %v1154
    %v1156 = vpop.f32.mrf.mxu0
    %v1157 = vadd.f32 0.0, %v1156
    %1158 = vdwg.mxu0
    %v1161 = vunpack.c.l.b16 %v993
    %v1162 = vunpack.c.l.b16 %v994
    %v1163 = vpack.c.b16 %v1162, %v1161
    %v1166 = vsel %vm265, %v1066, 0
    %1168 = vmatpush.bf16.msra.mxu0 0
    %1169 = vmatpush.bf16.msra.mxu0 0
    %1170 = vmatpush.bf16.msra.mxu0 0
    %1171 = vmatpush.bf16.msra.mxu0 0
    %1172 = vmatpush.bf16.msra.mxu0 0
    %1173 = vmatpush.bf16.msra.mxu0 0
    %1174 = vmatpush.bf16.msra.mxu0 0
    %1175 = vmatpush.bf16.msra.mxu0 %v1163
    %1176 = vmatmul.bf16.gmra.mxu0 %v1166
    %v1177 = vpop.f32.mrf.mxu0
    %v1178 = vadd.f32 %v1155, %v1177
    %v1179 = vpop.f32.mrf.mxu0
    %v1180 = vadd.f32 %v1157, %v1179
    %1181 = vdwg.mxu0
    %1182 = vrot.lane.b32.xlu0 %v1001, 96
    %v1183 = vpop.permute.xlu0 %1182
    %1184 = vrot.lane.b32.xlu0 %v1001, 32
    %v1185 = vpop.permute.xlu0 %1184
    %v1187 = vsel %vm265, %v1183, 0
    %v1190 = vsel %vm265, %v1185, 0
    %1192 = vmatpush.bf16.xpose.msra.mxu0 0
    %1193 = vmatpush.bf16.xpose.msra.mxu0 0
    %1194 = vmatpush.bf16.xpose.msra.mxu0 0
    %1195 = vmatpush.bf16.xpose.msra.mxu0 0
    %1196 = vmatpush.bf16.xpose.msra.mxu0 0
    %1197 = vmatpush.bf16.xpose.msra.mxu0 0
    %1198 = vmatpush.bf16.xpose.msra.mxu0 0
    %1199 = vmatpush.bf16.xpose.msra.mxu0 %v1190
    %1200 = vmatmul.bf16.gmra.mxu0 %v1187
    %v1201 = vpop.f32.mrf.mxu0
    %v1202 = vadd.f32 %v163, %v1201
    %v1203 = vpop.f32.mrf.mxu0
    %v1204 = vadd.f32 %v164, %v1203
    %1205 = vdwg.mxu0
    %v1206 = vsel %vm265, %v1202, -inf
    %1207 = vmax.xlane.f32.xlu0 %v1206
    %v1208 = vpop.xlane.xlu0 %1207
    %v1209 = vsel %vm265, %v1204, -inf
    %1210 = vmax.xlane.f32.xlu0 %v1209
    %v1211 = vpop.xlane.xlu0 %1210
    %v1212 = vsub.f32 %v1202, %v1208
    %v1213 = vsub.f32 %v1204, %v1211
    %v1214 = vmul.f32 %v1212, 1.442695
    %v1215 = vpow.pop %v1214
    %v1216 = vmul.f32 %v1213, 1.442695
    %v1217 = vpow.pop %v1216
    %v1218 = vsel %vm265, %v1215, 0.0
    %1219 = vadd.xlane.f32.xlu0 %v1218
    %v1220 = vpop.xlane.xlu0 %1219
    %v1221 = vsel %vm265, %v1217, 0.0
    %1222 = vadd.xlane.f32.xlu0 %v1221
    %v1223 = vpop.xlane.xlu0 %1222
    %v1224 = vrcp.pop %v1220
    %v1225 = vrcp.pop %v1223
    %v1226 = vmul.f32 %v1215, %v1224
    %v1227 = vmul.f32 %v1217, %v1225
    %v1228 = vpack.c.bf16 %v1227, %v1226
    %1229 = vrot.lane.b32.xlu0 %v1002, 96
    %v1230 = vpop.permute.xlu0 %1229
    %v1233 = vsel %vm265, %v1228, 0
    %1235 = vmatpush.bf16.msra.mxu0 0
    %1236 = vmatpush.bf16.msra.mxu0 0
    %1237 = vmatpush.bf16.msra.mxu0 0
    %1238 = vmatpush.bf16.msra.mxu0 0
    %1239 = vmatpush.bf16.msra.mxu0 0
    %1240 = vmatpush.bf16.msra.mxu0 0
    %1241 = vmatpush.bf16.msra.mxu0 0
    %1242 = vmatpush.bf16.msra.mxu0 %v1230
    %1243 = vmatmul.bf16.gmra.mxu0 %v1233
    %v1244 = vpop.f32.mrf.mxu0
    %v1245 = vadd.f32 0.0, %v1244
    %v1246 = vpop.f32.mrf.mxu0
    %v1247 = vadd.f32 0.0, %v1246
    %1248 = vdwg.mxu0
    %v1249 = vpack.c.bf16 %v1247, %v1245
    %v1252 = vunpack.c.l.b16 %v997
    %v1253 = vunpack.c.l.b16 %v998
    %v1254 = vpack.c.b16 %v1253, %v1252
    %v1257 = vsel %vm265, %v1249, 0
    %1259 = vmatpush.bf16.msra.mxu0 0
    %1260 = vmatpush.bf16.msra.mxu0 0
    %1261 = vmatpush.bf16.msra.mxu0 0
    %1262 = vmatpush.bf16.msra.mxu0 0
    %1263 = vmatpush.bf16.msra.mxu0 0
    %1264 = vmatpush.bf16.msra.mxu0 0
    %1265 = vmatpush.bf16.msra.mxu0 0
    %1266 = vmatpush.bf16.msra.mxu0 %v1254
    %1267 = vmatmul.bf16.gmra.mxu0 %v1257
    %v1268 = vpop.f32.mrf.mxu0
    %v1269 = vadd.f32 0.0, %v1268
    %v1270 = vpop.f32.mrf.mxu0
    %v1271 = vadd.f32 0.0, %v1270
    %1272 = vdwg.mxu0
    %v1273 = vadd.f32 %v1178, %v1269
    %v1274 = vadd.f32 %v1180, %v1271
    %1275 = vrot.lane.b32.xlu0 %v1001, 80
    %v1276 = vpop.permute.xlu0 %1275
    %1277 = vrot.lane.b32.xlu0 %v1001, 16
    %v1278 = vpop.permute.xlu0 %1277
    %v1280 = vsel %vm265, %v1276, 0
    %v1283 = vsel %vm265, %v1278, 0
    %1285 = vmatpush.bf16.xpose.msra.mxu0 0
    %1286 = vmatpush.bf16.xpose.msra.mxu0 0
    %1287 = vmatpush.bf16.xpose.msra.mxu0 0
    %1288 = vmatpush.bf16.xpose.msra.mxu0 0
    %1289 = vmatpush.bf16.xpose.msra.mxu0 0
    %1290 = vmatpush.bf16.xpose.msra.mxu0 0
    %1291 = vmatpush.bf16.xpose.msra.mxu0 0
    %1292 = vmatpush.bf16.xpose.msra.mxu0 %v1283
    %1293 = vmatmul.bf16.gmra.mxu0 %v1280
    %v1294 = vpop.f32.mrf.mxu0
    %v1295 = vadd.f32 %v163, %v1294
    %v1296 = vpop.f32.mrf.mxu0
    %v1297 = vadd.f32 %v164, %v1296
    %1298 = vdwg.mxu0
    %v1299 = vsel %vm265, %v1295, -inf
    %1300 = vmax.xlane.f32.xlu0 %v1299
    %v1301 = vpop.xlane.xlu0 %1300
    %v1302 = vsel %vm265, %v1297, -inf
    %1303 = vmax.xlane.f32.xlu0 %v1302
    %v1304 = vpop.xlane.xlu0 %1303
    %v1305 = vsub.f32 %v1295, %v1301
    %v1306 = vsub.f32 %v1297, %v1304
    %v1307 = vmul.f32 %v1305, 1.442695
    %v1308 = vpow.pop %v1307
    %v1309 = vmul.f32 %v1306, 1.442695
    %v1310 = vpow.pop %v1309
    %v1311 = vsel %vm265, %v1308, 0.0
    %1312 = vadd.xlane.f32.xlu0 %v1311
    %v1313 = vpop.xlane.xlu0 %1312
    %v1314 = vsel %vm265, %v1310, 0.0
    %1315 = vadd.xlane.f32.xlu0 %v1314
    %v1316 = vpop.xlane.xlu0 %1315
    %v1317 = vrcp.pop %v1313
    %v1318 = vrcp.pop %v1316
    %v1319 = vmul.f32 %v1308, %v1317
    %v1320 = vmul.f32 %v1310, %v1318
    %v1321 = vpack.c.bf16 %v1320, %v1319
    %1322 = vrot.lane.b32.xlu0 %v1002, 80
    %v1323 = vpop.permute.xlu0 %1322
    %v1326 = vsel %vm265, %v1321, 0
    %1328 = vmatpush.bf16.msra.mxu0 0
    %1329 = vmatpush.bf16.msra.mxu0 0
    %1330 = vmatpush.bf16.msra.mxu0 0
    %1331 = vmatpush.bf16.msra.mxu0 0
    %1332 = vmatpush.bf16.msra.mxu0 0
    %1333 = vmatpush.bf16.msra.mxu0 0
    %1334 = vmatpush.bf16.msra.mxu0 0
    %1335 = vmatpush.bf16.msra.mxu0 %v1323
    %1336 = vmatmul.bf16.gmra.mxu0 %v1326
    %v1337 = vpop.f32.mrf.mxu0
    %v1338 = vadd.f32 0.0, %v1337
    %v1339 = vpop.f32.mrf.mxu0
    %v1340 = vadd.f32 0.0, %v1339
    %1341 = vdwg.mxu0
    %v1342 = vpack.c.bf16 %v1340, %v1338
    %v1345 = vunpack.c.l.b16 %v999
    %v1346 = vunpack.c.l.b16 %v1000
    %v1347 = vpack.c.b16 %v1346, %v1345
    %v1350 = vsel %vm265, %v1342, 0
    %1352 = vmatpush.bf16.msra.mxu0 0
    %1353 = vmatpush.bf16.msra.mxu0 0
    %1354 = vmatpush.bf16.msra.mxu0 0
    %1355 = vmatpush.bf16.msra.mxu0 0
    %1356 = vmatpush.bf16.msra.mxu0 0
    %1357 = vmatpush.bf16.msra.mxu0 0
    %1358 = vmatpush.bf16.msra.mxu0 0
    %1359 = vmatpush.bf16.msra.mxu0 %v1347
    %1360 = vmatmul.bf16.gmra.mxu0 %v1350
    %v1361 = vpop.f32.mrf.mxu0
    %v1362 = vadd.f32 0.0, %v1361
    %v1363 = vpop.f32.mrf.mxu0
    %v1364 = vadd.f32 0.0, %v1363
    %1365 = vdwg.mxu0
    %v1366 = vadd.f32 %v1273, %v1362
    %v1367 = vadd.f32 %v1274, %v1364
    %s1368 = scalar_lea.vmem %s5, 1
    %v1369 = vld [vmem:[%s1368] sm:$0x1]
    %v1371 = vperm.slane %v1369, 0
    %v1373 = vadd.f32 %v1366, %v1371
    %v1374 = vadd.f32 %v1367, %v1371
    %v1375 = vadd.f32 %v902, %v1373
    %v1376 = vadd.f32 %v903, %v1374
    %s1377 = scalar_lea.vmem %s6, 1
    %v1378 = vld [vmem:[%s1377] sm:$0x1]
    %s1379 = scalar_lea.vmem %s7, 1
    %v1380 = vld [vmem:[%s1379] sm:$0x1]
    %v1381 = vsel %vm220, %v1375, 0.0
    %1382 = vadd.xlane.f32.xlu0 %v1381
    %v1383 = vpop.xlane.xlu0 %1382
    %v1384 = vsel %vm220, %v1376, 0.0
    %1385 = vadd.xlane.f32.xlu0 %v1384
    %v1386 = vpop.xlane.xlu0 %1385
    %v1387 = vmul.f32 %v1383, %v650
    %v1388 = vmul.f32 %v1386, %v650
    %v1389 = vmul.f32 %v1375, %v1375
    %v1390 = vmul.f32 %v1376, %v1376
    %v1391 = vsel %vm220, %v1389, 0.0
    %1392 = vadd.xlane.f32.xlu0 %v1391
    %v1393 = vpop.xlane.xlu0 %1392
    %v1394 = vsel %vm220, %v1390, 0.0
    %1395 = vadd.xlane.f32.xlu0 %v1394
    %v1396 = vpop.xlane.xlu0 %1395
    %v1397 = vmul.f32 %v1393, %v650
    %v1398 = vmul.f32 %v1396, %v650
    %v1399 = vmul.f32 %v1387, %v1387
    %v1400 = vmul.f32 %v1388, %v1388
    %v1401 = vsub.f32 %v1397, %v1399
    %v1402 = vsub.f32 %v1398, %v1400
    %v1403 = vsub.f32 %v1375, %v1387
    %v1404 = vsub.f32 %v1376, %v1388
    %v1405 = vadd.f32 %v1401, 1e-05
    %v1406 = vadd.f32 %v1402, 1e-05
    %v1407 = vrsqrt.pop %v1405
    %v1408 = vmul.f32 %v1407, %v1405
    %v1409 = vmul.f32 %v1408, %v1407
    %v1410 = vmul.f32 0.5, %v1409
    %v1411 = vsub.f32 1.5, %v1410
    %v1412 = vmul.f32 %v1407, %v1411
    %vm1413 = vweird.f32 %v1405
    %vm1414 = vweird.f32 %v1407
    %vm1415 = vmor %vm1413, %vm1414
    %v1416 = vsel %vm1415, %v1407, %v1412
    %v1417 = vrsqrt.pop %v1406
    %v1418 = vmul.f32 %v1417, %v1406
    %v1419 = vmul.f32 %v1418, %v1417
    %v1420 = vmul.f32 0.5, %v1419
    %v1421 = vsub.f32 1.5, %v1420
    %v1422 = vmul.f32 %v1417, %v1421
    %vm1423 = vweird.f32 %v1406
    %vm1424 = vweird.f32 %v1417
    %vm1425 = vmor %vm1423, %vm1424
    %v1426 = vsel %vm1425, %v1417, %v1422
    %v1427 = vmul.f32 %v1403, %v1416
    %v1428 = vmul.f32 %v1404, %v1426
    %v1430 = vperm.slane %v1378, 0
    %v1432 = vmul.f32 %v1427, %v1430
    %v1433 = vmul.f32 %v1428, %v1430
    %v1435 = vperm.slane %v1380, 0
    %v1437 = vadd.f32 %v1432, %v1435
    %v1438 = vadd.f32 %v1433, %v1435
    %s1439 = scalar_lea.vmem %s8, 32
    %v1440 = vld [vmem:[%s1439] sm:$0xf]
    %v1441 = vld [vmem:[%s1439 + $0x4] sm:$0xf]
    %v1442 = vld [vmem:[%s1439 + $0x8] sm:$0xf]
    %v1443 = vld [vmem:[%s1439 + $0xc] sm:$0xf]
    %v1444 = vld [vmem:[%s1439 + $0x10] sm:$0xf]
    %v1445 = vld [vmem:[%s1439 + $0x14] sm:$0xf]
    %v1446 = vld [vmem:[%s1439 + $0x18] sm:$0xf]
    %v1447 = vld [vmem:[%s1439 + $0x1c] sm:$0xf]
    %v1448 = vpack.c.bf16 %v1438, %v1437
    %s1449 = scalar_lea.vmem %s9, 1
    %v1450 = vld [vmem:[%s1449] sm:$0x1]
    %v1452 = vperm.slane %v1450, 0
    %v1462 = vunpack.c.l.b16 %v1440
    %v1463 = vunpack.c.l.b16 %v1441
    %v1464 = vunpack.c.l.b16 %v1442
    %v1465 = vunpack.c.l.b16 %v1443
    %v1466 = vunpack.c.l.b16 %v1444
    %v1467 = vunpack.c.l.b16 %v1445
    %v1468 = vunpack.c.l.b16 %v1446
    %v1469 = vunpack.c.l.b16 %v1447
    %v1470 = vpack.c.b16 %v1463, %v1462
    %v1471 = vpack.c.b16 %v1465, %v1464
    %v1472 = vpack.c.b16 %v1467, %v1466
    %v1473 = vpack.c.b16 %v1469, %v1468
    %v1479 = vsel %vm220, %v1448, 0
    %1481 = vmatpush.bf16.msra.mxu0 0
    %1482 = vmatpush.bf16.msra.mxu0 0
    %1483 = vmatpush.bf16.msra.mxu0 0
    %1484 = vmatpush.bf16.msra.mxu0 0
    %1485 = vmatpush.bf16.msra.mxu0 %v1473
    %1486 = vmatpush.bf16.msra.mxu0 %v1472
    %1487 = vmatpush.bf16.msra.mxu0 %v1471
    %1488 = vmatpush.bf16.msra.mxu0 %v1470
    %1489 = vmatmul.bf16.gmra.mxu0 %v1479
    %v1490 = vpop.f32.mrf.mxu0
    %v1491 = vadd.f32 %v1452, %v1490
    %v1492 = vpop.f32.mrf.mxu0
    %v1493 = vadd.f32 %v1452, %v1492
    %1494 = vdwg.mxu0
    %v1495 = vmax.f32 %v1491, 0.0
    %v1496 = vmax.f32 %v1493, 0.0
    %s1497 = scalar_lea.vmem %s10, 64
    %v1498 = vld [vmem:[%s1497] sm:$0xf]
    %v1499 = vld [vmem:[%s1497 + $0x4] sm:$0xf]
    %v1500 = vld [vmem:[%s1497 + $0x8] sm:$0xf]
    %v1501 = vld [vmem:[%s1497 + $0xc] sm:$0xf]
    %v1502 = vld [vmem:[%s1497 + $0x10] sm:$0xf]
    %v1503 = vld [vmem:[%s1497 + $0x14] sm:$0xf]
    %v1504 = vld [vmem:[%s1497 + $0x18] sm:$0xf]
    %v1505 = vld [vmem:[%s1497 + $0x1c] sm:$0xf]
    %v1506 = vld [vmem:[%s1497 + $0x20] sm:$0xf]
    %v1507 = vld [vmem:[%s1497 + $0x24] sm:$0xf]
    %v1508 = vld [vmem:[%s1497 + $0x28] sm:$0xf]
    %v1509 = vld [vmem:[%s1497 + $0x2c] sm:$0xf]
    %v1510 = vld [vmem:[%s1497 + $0x30] sm:$0xf]
    %v1511 = vld [vmem:[%s1497 + $0x34] sm:$0xf]
    %v1512 = vld [vmem:[%s1497 + $0x38] sm:$0xf]
    %v1513 = vld [vmem:[%s1497 + $0x3c] sm:$0xf]
    %v1514 = vpack.c.bf16 %v1496, %v1495
    %s1515 = scalar_lea.vmem %s11, 1
    %v1516 = vld [vmem:[%s1515] sm:$0x1]
    %v1518 = vperm.slane %v1516, 0
    %v1536 = vunpack.c.l.b16 %v1498
    %v1537 = vunpack.c.l.b16 %v1499
    %v1538 = vunpack.c.l.b16 %v1500
    %v1539 = vunpack.c.l.b16 %v1501
    %v1540 = vunpack.c.l.b16 %v1502
    %v1541 = vunpack.c.l.b16 %v1503
    %v1542 = vunpack.c.l.b16 %v1504
    %v1543 = vunpack.c.l.b16 %v1505
    %v1544 = vunpack.c.l.b16 %v1506
    %v1545 = vunpack.c.l.b16 %v1507
    %v1546 = vunpack.c.l.b16 %v1508
    %v1547 = vunpack.c.l.b16 %v1509
    %v1548 = vunpack.c.l.b16 %v1510
    %v1549 = vunpack.c.l.b16 %v1511
    %v1550 = vunpack.c.l.b16 %v1512
    %v1551 = vunpack.c.l.b16 %v1513
    %v1552 = vpack.c.b16 %v1537, %v1536
    %v1553 = vpack.c.b16 %v1539, %v1538
    %v1554 = vpack.c.b16 %v1541, %v1540
    %v1555 = vpack.c.b16 %v1543, %v1542
    %v1556 = vpack.c.b16 %v1545, %v1544
    %v1557 = vpack.c.b16 %v1547, %v1546
    %v1558 = vpack.c.b16 %v1549, %v1548
    %v1559 = vpack.c.b16 %v1551, %v1550
    %1568 = vmatpush.bf16.msra.mxu0 %v1559
    %1569 = vmatpush.bf16.msra.mxu0 %v1558
    %1570 = vmatpush.bf16.msra.mxu0 %v1557
    %1571 = vmatpush.bf16.msra.mxu0 %v1556
    %1572 = vmatpush.bf16.msra.mxu0 %v1555
    %1573 = vmatpush.bf16.msra.mxu0 %v1554
    %1574 = vmatpush.bf16.msra.mxu0 %v1553
    %1575 = vmatpush.bf16.msra.mxu0 %v1552
    %1576 = vmatmul.bf16.gmra.mxu0 %v1514
    %v1577 = vpop.f32.mrf.mxu0
    %v1578 = vadd.f32 %v1518, %v1577
    %v1579 = vpop.f32.mrf.mxu0
    %v1580 = vadd.f32 %v1518, %v1579
    %1581 = vdwg.mxu0
    %v1582 = vadd.f32 %v1437, %v1578
    %v1583 = vadd.f32 %v1438, %v1580
    %s1584 = scalar_lea.vmem %s12, 1
    %v1585 = vld [vmem:[%s1584] sm:$0x1]
    %s1586 = scalar_lea.vmem %s13, 1
    %v1587 = vld [vmem:[%s1586] sm:$0x1]
    %v1588 = vsel %vm220, %v1582, 0.0
    %1589 = vadd.xlane.f32.xlu0 %v1588
    %v1590 = vpop.xlane.xlu0 %1589
    %v1591 = vsel %vm220, %v1583, 0.0
    %1592 = vadd.xlane.f32.xlu0 %v1591
    %v1593 = vpop.xlane.xlu0 %1592
    %v1594 = vmul.f32 %v1590, %v650
    %v1595 = vmul.f32 %v1593, %v650
    %v1596 = vmul.f32 %v1582, %v1582
    %v1597 = vmul.f32 %v1583, %v1583
    %v1598 = vsel %vm220, %v1596, 0.0
    %1599 = vadd.xlane.f32.xlu0 %v1598
    %v1600 = vpop.xlane.xlu0 %1599
    %v1601 = vsel %vm220, %v1597, 0.0
    %1602 = vadd.xlane.f32.xlu0 %v1601
    %v1603 = vpop.xlane.xlu0 %1602
    %v1604 = vmul.f32 %v1600, %v650
    %v1605 = vmul.f32 %v1603, %v650
    %v1606 = vmul.f32 %v1594, %v1594
    %v1607 = vmul.f32 %v1595, %v1595
    %v1608 = vsub.f32 %v1604, %v1606
    %v1609 = vsub.f32 %v1605, %v1607
    %v1610 = vsub.f32 %v1582, %v1594
    %v1611 = vsub.f32 %v1583, %v1595
    %v1612 = vadd.f32 %v1608, 1e-05
    %v1613 = vadd.f32 %v1609, 1e-05
    %v1614 = vrsqrt.pop %v1612
    %v1615 = vmul.f32 %v1614, %v1612
    %v1616 = vmul.f32 %v1615, %v1614
    %v1617 = vmul.f32 0.5, %v1616
    %v1618 = vsub.f32 1.5, %v1617
    %v1619 = vmul.f32 %v1614, %v1618
    %vm1620 = vweird.f32 %v1612
    %vm1621 = vweird.f32 %v1614
    %vm1622 = vmor %vm1620, %vm1621
    %v1623 = vsel %vm1622, %v1614, %v1619
    %v1624 = vrsqrt.pop %v1613
    %v1625 = vmul.f32 %v1624, %v1613
    %v1626 = vmul.f32 %v1625, %v1624
    %v1627 = vmul.f32 0.5, %v1626
    %v1628 = vsub.f32 1.5, %v1627
    %v1629 = vmul.f32 %v1624, %v1628
    %vm1630 = vweird.f32 %v1613
    %vm1631 = vweird.f32 %v1624
    %vm1632 = vmor %vm1630, %vm1631
    %v1633 = vsel %vm1632, %v1624, %v1629
    %v1634 = vmul.f32 %v1610, %v1623
    %v1635 = vmul.f32 %v1611, %v1633
    %v1637 = vperm.slane %v1585, 0
    %v1639 = vmul.f32 %v1634, %v1637
    %v1640 = vmul.f32 %v1635, %v1637
    %v1642 = vperm.slane %v1587, 0
    %v1644 = vadd.f32 %v1639, %v1642
    %v1645 = vadd.f32 %v1640, %v1642
    %v1646 = vld [vmem:[%s14] sm:$0xff]
    %v1647 = vld [vmem:[%s14 + $0x8] sm:$0xff]
    %v1648 = vld [vmem:[%s14 + $0x10] sm:$0xff]
    %v1649 = vld [vmem:[%s14 + $0x18] sm:$0xff]
    %v1650 = vld [vmem:[%s14 + $0x20] sm:$0xff]
    %v1651 = vld [vmem:[%s14 + $0x28] sm:$0xff]
    %v1652 = vld [vmem:[%s14 + $0x30] sm:$0xff]
    %v1653 = vld [vmem:[%s14 + $0x38] sm:$0xff]
    %v1654 = vld [vmem:[%s14 + $0x40] sm:$0xff]
    %v1655 = vld [vmem:[%s14 + $0x48] sm:$0xff]
    %v1656 = vld [vmem:[%s14 + $0x50] sm:$0xff]
    %v1657 = vld [vmem:[%s14 + $0x58] sm:$0xff]
    %v1658 = vld [vmem:[%s14 + $0x60] sm:$0xff]
    %v1659 = vld [vmem:[%s14 + $0x68] sm:$0xff]
    %v1660 = vld [vmem:[%s14 + $0x70] sm:$0xff]
    %v1661 = vld [vmem:[%s14 + $0x78] sm:$0xff]
    %v1662 = vld [vmem:[%s14 + $0x80] sm:$0xff]
    %v1663 = vld [vmem:[%s14 + $0x88] sm:$0xff]
    %v1664 = vld [vmem:[%s14 + $0x90] sm:$0xff]
    %v1665 = vld [vmem:[%s14 + $0x98] sm:$0xff]
    %v1666 = vld [vmem:[%s14 + $0xa0] sm:$0xff]
    %v1667 = vld [vmem:[%s14 + $0xa8] sm:$0xff]
    %v1668 = vld [vmem:[%s14 + $0xb0] sm:$0xff]
    %v1669 = vld [vmem:[%s14 + $0xb8] sm:$0xff]
    %v1670 = vld [vmem:[%s14 + $0xc0] sm:$0xff]
    %v1671 = vld [vmem:[%s14 + $0xc8] sm:$0xff]
    %v1672 = vld [vmem:[%s14 + $0xd0] sm:$0xff]
    %v1673 = vld [vmem:[%s14 + $0xd8] sm:$0xff]
    %v1674 = vld [vmem:[%s14 + $0xe0] sm:$0xff]
    %v1675 = vld [vmem:[%s14 + $0xe8] sm:$0xff]
    %v1676 = vld [vmem:[%s14 + $0xf0] sm:$0xff]
    %v1677 = vld [vmem:[%s14 + $0xf8] sm:$0xff]
    %v1678 = vpack.c.bf16 %v1645, %v1644
    %v1679 = vld [vmem:[%s15] sm:$0xff]
    %v1681 = vperm.slane %v1679, 0
    %v1682 = vperm.slane %v1679, 1
    %v1683 = vperm.slane %v1679, 2
    %v1684 = vperm.slane %v1679, 3
    %v1685 = vperm.slane %v1679, 4
    %v1686 = vperm.slane %v1679, 5
    %v1687 = vperm.slane %v1679, 6
    %v1688 = vperm.slane %v1679, 7
    %v1729 = vunpack.c.l.b16 %v1646
    %v1730 = vunpack.c.h.b16 %v1646
    %v1731 = vunpack.c.l.b16 %v1647
    %v1732 = vunpack.c.h.b16 %v1647
    %v1733 = vunpack.c.l.b16 %v1648
    %v1734 = vunpack.c.h.b16 %v1648
    %v1735 = vunpack.c.l.b16 %v1649
    %v1736 = vunpack.c.h.b16 %v1649
    %v1737 = vunpack.c.l.b16 %v1650
    %v1738 = vunpack.c.h.b16 %v1650
    %v1739 = vunpack.c.l.b16 %v1651
    %v1740 = vunpack.c.h.b16 %v1651
    %v1741 = vunpack.c.l.b16 %v1652
    %v1742 = vunpack.c.h.b16 %v1652
    %v1743 = vunpack.c.l.b16 %v1653
    %v1744 = vunpack.c.h.b16 %v1653
    %v1745 = vunpack.c.l.b16 %v1654
    %v1746 = vunpack.c.h.b16 %v1654
    %v1747 = vunpack.c.l.b16 %v1655
    %v1748 = vunpack.c.h.b16 %v1655
    %v1749 = vunpack.c.l.b16 %v1656
    %v1750 = vunpack.c.h.b16 %v1656
    %v1751 = vunpack.c.l.b16 %v1657
    %v1752 = vunpack.c.h.b16 %v1657
    %v1753 = vunpack.c.l.b16 %v1658
    %v1754 = vunpack.c.h.b16 %v1658
    %v1755 = vunpack.c.l.b16 %v1659
    %v1756 = vunpack.c.h.b16 %v1659
    %v1757 = vunpack.c.l.b16 %v1660
    %v1758 = vunpack.c.h.b16 %v1660
    %v1759 = vunpack.c.l.b16 %v1661
    %v1760 = vunpack.c.h.b16 %v1661
    %v1761 = vunpack.c.l.b16 %v1662
    %v1762 = vunpack.c.h.b16 %v1662
    %v1763 = vunpack.c.l.b16 %v1663
    %v1764 = vunpack.c.h.b16 %v1663
    %v1765 = vunpack.c.l.b16 %v1664
    %v1766 = vunpack.c.h.b16 %v1664
    %v1767 = vunpack.c.l.b16 %v1665
    %v1768 = vunpack.c.h.b16 %v1665
    %v1769 = vunpack.c.l.b16 %v1666
    %v1770 = vunpack.c.h.b16 %v1666
    %v1771 = vunpack.c.l.b16 %v1667
    %v1772 = vunpack.c.h.b16 %v1667
    %v1773 = vunpack.c.l.b16 %v1668
    %v1774 = vunpack.c.h.b16 %v1668
    %v1775 = vunpack.c.l.b16 %v1669
    %v1776 = vunpack.c.h.b16 %v1669
    %v1777 = vunpack.c.l.b16 %v1670
    %v1778 = vunpack.c.h.b16 %v1670
    %v1779 = vunpack.c.l.b16 %v1671
    %v1780 = vunpack.c.h.b16 %v1671
    %v1781 = vunpack.c.l.b16 %v1672
    %v1782 = vunpack.c.h.b16 %v1672
    %v1783 = vunpack.c.l.b16 %v1673
    %v1784 = vunpack.c.h.b16 %v1673
    %v1785 = vunpack.c.l.b16 %v1674
    %v1786 = vunpack.c.h.b16 %v1674
    %v1787 = vunpack.c.l.b16 %v1675
    %v1788 = vunpack.c.h.b16 %v1675
    %v1789 = vunpack.c.l.b16 %v1676
    %v1790 = vunpack.c.h.b16 %v1676
    %v1791 = vunpack.c.l.b16 %v1677
    %v1792 = vunpack.c.h.b16 %v1677
    %v1793 = vpack.c.b16 %v1737, %v1729
    %v1794 = vpack.c.b16 %v1738, %v1730
    %v1795 = vpack.c.b16 %v1739, %v1731
    %v1796 = vpack.c.b16 %v1740, %v1732
    %v1797 = vpack.c.b16 %v1741, %v1733
    %v1798 = vpack.c.b16 %v1742, %v1734
    %v1799 = vpack.c.b16 %v1743, %v1735
    %v1800 = vpack.c.b16 %v1744, %v1736
    %v1801 = vpack.c.b16 %v1753, %v1745
    %v1802 = vpack.c.b16 %v1754, %v1746
    %v1803 = vpack.c.b16 %v1755, %v1747
    %v1804 = vpack.c.b16 %v1756, %v1748
    %v1805 = vpack.c.b16 %v1757, %v1749
    %v1806 = vpack.c.b16 %v1758, %v1750
    %v1807 = vpack.c.b16 %v1759, %v1751
    %v1808 = vpack.c.b16 %v1760, %v1752
    %v1809 = vpack.c.b16 %v1769, %v1761
    %v1810 = vpack.c.b16 %v1770, %v1762
    %v1811 = vpack.c.b16 %v1771, %v1763
    %v1812 = vpack.c.b16 %v1772, %v1764
    %v1813 = vpack.c.b16 %v1773, %v1765
    %v1814 = vpack.c.b16 %v1774, %v1766
    %v1815 = vpack.c.b16 %v1775, %v1767
    %v1816 = vpack.c.b16 %v1776, %v1768
    %v1817 = vpack.c.b16 %v1785, %v1777
    %v1818 = vpack.c.b16 %v1786, %v1778
    %v1819 = vpack.c.b16 %v1787, %v1779
    %v1820 = vpack.c.b16 %v1788, %v1780
    %v1821 = vpack.c.b16 %v1789, %v1781
    %v1822 = vpack.c.b16 %v1790, %v1782
    %v1823 = vpack.c.b16 %v1791, %v1783
    %v1824 = vpack.c.b16 %v1792, %v1784
    %v1858 = vsel %vm220, %v1678, 0
    %1860 = vmatpush.bf16.msra.mxu0 0
    %1861 = vmatpush.bf16.msra.mxu0 0
    %1862 = vmatpush.bf16.msra.mxu0 0
    %1863 = vmatpush.bf16.msra.mxu0 0
    %1864 = vmatpush.bf16.msra.mxu0 %v1817
    %1865 = vmatpush.bf16.msra.mxu0 %v1809
    %1866 = vmatpush.bf16.msra.mxu0 %v1801
    %1867 = vmatpush.bf16.msra.mxu0 %v1793
    %1868 = vmatmul.bf16.gmra.mxu0 %v1858
    %v1869 = vpop.f32.mrf.mxu0
    %v1870 = vadd.f32 %v1681, %v1869
    %v1871 = vpop.f32.mrf.mxu0
    %v1872 = vadd.f32 %v1681, %v1871
    %1873 = vdwg.mxu0
    %1874 = vmatpush.bf16.msra.mxu0 0
    %1875 = vmatpush.bf16.msra.mxu0 0
    %1876 = vmatpush.bf16.msra.mxu0 0
    %1877 = vmatpush.bf16.msra.mxu0 0
    %1878 = vmatpush.bf16.msra.mxu0 %v1818
    %1879 = vmatpush.bf16.msra.mxu0 %v1810
    %1880 = vmatpush.bf16.msra.mxu0 %v1802
    %1881 = vmatpush.bf16.msra.mxu0 %v1794
    %1882 = vmatmul.bf16.gmra.mxu0 %v1858
    %v1883 = vpop.f32.mrf.mxu0
    %v1884 = vadd.f32 %v1682, %v1883
    %v1885 = vpop.f32.mrf.mxu0
    %v1886 = vadd.f32 %v1682, %v1885
    %1887 = vdwg.mxu0
    %1888 = vmatpush.bf16.msra.mxu0 0
    %1889 = vmatpush.bf16.msra.mxu0 0
    %1890 = vmatpush.bf16.msra.mxu0 0
    %1891 = vmatpush.bf16.msra.mxu0 0
    %1892 = vmatpush.bf16.msra.mxu0 %v1819
    %1893 = vmatpush.bf16.msra.mxu0 %v1811
    %1894 = vmatpush.bf16.msra.mxu0 %v1803
    %1895 = vmatpush.bf16.msra.mxu0 %v1795
    %1896 = vmatmul.bf16.gmra.mxu0 %v1858
    %v1897 = vpop.f32.mrf.mxu0
    %v1898 = vadd.f32 %v1683, %v1897
    %v1899 = vpop.f32.mrf.mxu0
    %v1900 = vadd.f32 %v1683, %v1899
    %1901 = vdwg.mxu0
    %1902 = vmatpush.bf16.msra.mxu0 0
    %1903 = vmatpush.bf16.msra.mxu0 0
    %1904 = vmatpush.bf16.msra.mxu0 0
    %1905 = vmatpush.bf16.msra.mxu0 0
    %1906 = vmatpush.bf16.msra.mxu0 %v1820
    %1907 = vmatpush.bf16.msra.mxu0 %v1812
    %1908 = vmatpush.bf16.msra.mxu0 %v1804
    %1909 = vmatpush.bf16.msra.mxu0 %v1796
    %1910 = vmatmul.bf16.gmra.mxu0 %v1858
    %v1911 = vpop.f32.mrf.mxu0
    %v1912 = vadd.f32 %v1684, %v1911
    %v1913 = vpop.f32.mrf.mxu0
    %v1914 = vadd.f32 %v1684, %v1913
    %1915 = vdwg.mxu0
    %1916 = vmatpush.bf16.msra.mxu0 0
    %1917 = vmatpush.bf16.msra.mxu0 0
    %1918 = vmatpush.bf16.msra.mxu0 0
    %1919 = vmatpush.bf16.msra.mxu0 0
    %1920 = vmatpush.bf16.msra.mxu0 %v1821
    %1921 = vmatpush.bf16.msra.mxu0 %v1813
    %1922 = vmatpush.bf16.msra.mxu0 %v1805
    %1923 = vmatpush.bf16.msra.mxu0 %v1797
    %1924 = vmatmul.bf16.gmra.mxu0 %v1858
    %v1925 = vpop.f32.mrf.mxu0
    %v1926 = vadd.f32 %v1685, %v1925
    %v1927 = vpop.f32.mrf.mxu0
    %v1928 = vadd.f32 %v1685, %v1927
    %1929 = vdwg.mxu0
    %1930 = vmatpush.bf16.msra.mxu0 0
    %1931 = vmatpush.bf16.msra.mxu0 0
    %1932 = vmatpush.bf16.msra.mxu0 0
    %1933 = vmatpush.bf16.msra.mxu0 0
    %1934 = vmatpush.bf16.msra.mxu0 %v1822
    %1935 = vmatpush.bf16.msra.mxu0 %v1814
    %1936 = vmatpush.bf16.msra.mxu0 %v1806
    %1937 = vmatpush.bf16.msra.mxu0 %v1798
    %1938 = vmatmul.bf16.gmra.mxu0 %v1858
    %v1939 = vpop.f32.mrf.mxu0
    %v1940 = vadd.f32 %v1686, %v1939
    %v1941 = vpop.f32.mrf.mxu0
    %v1942 = vadd.f32 %v1686, %v1941
    %1943 = vdwg.mxu0
    %1944 = vmatpush.bf16.msra.mxu0 0
    %1945 = vmatpush.bf16.msra.mxu0 0
    %1946 = vmatpush.bf16.msra.mxu0 0
    %1947 = vmatpush.bf16.msra.mxu0 0
    %1948 = vmatpush.bf16.msra.mxu0 %v1823
    %1949 = vmatpush.bf16.msra.mxu0 %v1815
    %1950 = vmatpush.bf16.msra.mxu0 %v1807
    %1951 = vmatpush.bf16.msra.mxu0 %v1799
    %1952 = vmatmul.bf16.gmra.mxu0 %v1858
    %v1953 = vpop.f32.mrf.mxu0
    %v1954 = vadd.f32 %v1687, %v1953
    %v1955 = vpop.f32.mrf.mxu0
    %v1956 = vadd.f32 %v1687, %v1955
    %1957 = vdwg.mxu0
    %1958 = vmatpush.bf16.msra.mxu0 0
    %1959 = vmatpush.bf16.msra.mxu0 0
    %1960 = vmatpush.bf16.msra.mxu0 0
    %1961 = vmatpush.bf16.msra.mxu0 0
    %1962 = vmatpush.bf16.msra.mxu0 %v1824
    %1963 = vmatpush.bf16.msra.mxu0 %v1816
    %1964 = vmatpush.bf16.msra.mxu0 %v1808
    %1965 = vmatpush.bf16.msra.mxu0 %v1800
    %1966 = vmatmul.bf16.gmra.mxu0 %v1858
    %v1967 = vpop.f32.mrf.mxu0
    %v1968 = vadd.f32 %v1688, %v1967
    %v1969 = vpop.f32.mrf.mxu0
    %v1970 = vadd.f32 %v1688, %v1969
    %1971 = vdwg.mxu0
    %1972 = vst [vmem:[%s16] sm:$0xff] %v1870
    %1973 = vst [vmem:[%s16 + $0x8] sm:$0xff] %v1884
    %1974 = vst [vmem:[%s16 + $0x10] sm:$0xff] %v1898
    %1975 = vst [vmem:[%s16 + $0x18] sm:$0xff] %v1912
    %1976 = vst [vmem:[%s16 + $0x20] sm:$0xff] %v1926
    %1977 = vst [vmem:[%s16 + $0x28] sm:$0xff] %v1940
    %1978 = vst [vmem:[%s16 + $0x30] sm:$0xff] %v1954
    %1979 = vst [vmem:[%s16 + $0x38] sm:$0xff] %v1968
    %1980 = vst [vmem:[%s16 + $0x40] sm:$0xff] %v1872
    %1981 = vst [vmem:[%s16 + $0x48] sm:$0xff] %v1886
    %1982 = vst [vmem:[%s16 + $0x50] sm:$0xff] %v1900
    %1983 = vst [vmem:[%s16 + $0x58] sm:$0xff] %v1914
    %1984 = vst [vmem:[%s16 + $0x60] sm:$0xff] %v1928
    %1985 = vst [vmem:[%s16 + $0x68] sm:$0xff] %v1942
    %1986 = vst [vmem:[%s16 + $0x70] sm:$0xff] %v1956
    %1987 = vst [vmem:[%s16 + $0x78] sm:$0xff] %v1970
    // Predicated region
    $region70: #{simple_transformer_forward.1} parent=1 // pred_check
      _
    $region71: #{simple_transformer_forward.1} parent=1 // pred_check_branch
      %1989 = sbr.rel (0) target = $region73
    $region72: #{simple_transformer_forward.1} parent=1 // pred_region
      _
    $region73: #{simple_transformer_forward.1} parent=1 // pred_fallthru
      _
    // Predicated region
    $region74: #{simple_transformer_forward.1} parent=1 // pred_check
      _
    $region75: #{simple_transformer_forward.1} parent=1 // pred_check_branch
      %1991 = sbr.rel (0) target = $region77
    $region76: #{simple_transformer_forward.1} parent=1 // pred_region
      _
    $region77: #{simple_transformer_forward.1} parent=1 // pred_fallthru
      _
    %1992 = vsyncpa [#allocation4], 1

</llo_original>
